<compile_context>
chip_gen: v7x
topology: tpu7x:2x2x1
jax: 0.10.0
libtpu: 0.0.40
codegen_flags: <defaults>
</compile_context>

<pallas_src>
import numpy as np
import jax
import jax.numpy as jnp
from jax import lax
from jax.experimental import pallas as pl
from jax.experimental.pallas import tpu as pltpu


def _elu(v):
    # F.elu with alpha=1 (exp only evaluated on the clamped arg to stay finite)
    return jnp.where(v > 0, v, jnp.exp(jnp.minimum(v, 0.0)) - 1.0)


# ------------------------------ kernel body -----------------------------------

def _make_kernel(H, WC, offs):
    """offs = (dc1, dc2, dc3, dr1, dr2, dr3, nin) column offsets in the weight slab."""
    OFF_DC1, OFF_DC2, OFF_DC3, OFF_DR1, OFF_DR2, OFF_DR3, OFF_NIN = offs

    def kernel(x1_ref, x2_ref, w_ref, b_ref, c1_ref, c2_ref):
        x1 = x1_ref[0]          # (H, W*C) lane-packed (w, c), one batch element
        x2 = x2_ref[0]

        def act(u):
            # concat_elu without materializing channel-minor interleave: the
            # elu(u) / elu(-u) halves are separate 64-lane blocks, matched by
            # the host-side weight row ordering.
            return jnp.concatenate([_elu(u), _elu(-u)], axis=1)     # (H, 2WC)

        def with_prev_row(a):
            # [current row | previous row (zero at h=0)] -> (H, 4WC), so the
            # whole 2-row causal kernel is one K=4WC dot.  Row shift = XLU roll
            # + VPU mask (no pad/concat/slice buffer).
            rolled = pltpu.roll(a, shift=1, axis=0)
            row = lax.broadcasted_iota(jnp.int32, a.shape, 0)
            prev = jnp.where(row == 0, jnp.zeros_like(a), rolled)
            return jnp.concatenate([a, prev], axis=1)

        def conv(u, off, ncol):
            # Full causal weight-norm conv as ONE MXU dot against a banded,
            # host-prefolded matrix (static column slice of the packed slab).
            A = with_prev_row(act(u))                                # (H, 4WC)
            q = jnp.dot(A, w_ref[:, off:off + ncol],
                        preferred_element_type=jnp.float32)
            return q + b_ref[:, off:off + ncol]

        # ---- vertical (down-shift) stream ----
        c = conv(x1, OFF_DC1, WC)
        c = conv(c, OFF_DC2, WC)
        y = conv(c, OFF_DC3, 2 * WC)            # dropout(p=0)==id, hc==0
        c1 = y[:, :WC] * jax.nn.sigmoid(y[:, WC:]) + x1
        c1_ref[0] = c1

        # ---- 1x1 weight-norm conv feeding the diagonal stream ----
        aux = jnp.dot(act(c1), w_ref[:2 * WC, OFF_NIN:OFF_NIN + WC],
                      preferred_element_type=jnp.float32)
        aux = aux + b_ref[:, OFF_NIN:OFF_NIN + WC]

        # ---- diagonal (down-right-shift) stream ----
        c = conv(x2, OFF_DR1, WC)
        c = conv(c, OFF_DR2, WC)
        y = conv(c + aux, OFF_DR3, 2 * WC)
        c2_ref[0] = y[:, :WC] * jax.nn.sigmoid(y[:, WC:]) + x2

    return kernel


# ------------------------- host-side weight folding ---------------------------
#
# Activation row layout fed to the dots (K axis of M):
#   row = dy*(2*W*C) + half*(W*C) + w_in*C + c_in
#     dy   : 0 -> current image row h, 1 -> previous row h-1 (causal pad)
#     half : 0 -> elu(u), 1 -> elu(-u)   (concat_elu input channel half*C+c_in)
# Output column layout (N axis):
#   cout == C :   col = w_out*C + o                       (matches x residual)
#   cout == 2C:   col = (o // C)*(W*C) + w_out*C + (o % C)  -> [a-gate | b-gate]

def _build_causal_matrix(w_oihw, bias, W, C):
    """(cout, 2C, 2, kw) causal conv (pad top=1, left=1[, right=1 if kw==3])."""
    w = np.asarray(w_oihw, np.float32)
    b = np.asarray(bias, np.float32)
    cout, cin2, kh, kw = w.shape
    assert kh == 2 and cin2 == 2 * C
    if cout == 2 * C:
        col = lambda wo, o: (o // C) * (W * C) + wo * C + (o % C)
    else:
        col = lambda wo, o: wo * cout + o
    M = np.zeros((4 * W * C, W * cout), np.float32)
    for dy in (0, 1):
        ky = 1 - dy                       # tap row; reads image row h - dy
        for half in (0, 1):
            for w_in in range(W):
                for c_in in range(C):
                    r = dy * (2 * W * C) + half * (W * C) + w_in * C + c_in
                    for kx in range(kw):
                        wo = w_in - kx + 1          # output column fed by this tap
                        if 0 <= wo < W:
                            for o in range(cout):
                                M[r, col(wo, o)] = w[o, half * C + c_in, ky, kx]
    brow = np.zeros((W * cout,), np.float32)
    for wo in range(W):
        for o in range(cout):
            brow[col(wo, o)] = b[o]
    return M, brow


def _build_nin_matrix(w_oihw, bias, W, C):
    """1x1 weight-norm conv; rows [2WC:) left zero (kernel only reads [:2WC))."""
    w = np.asarray(w_oihw, np.float32)
    b = np.asarray(bias, np.float32)
    cout = w.shape[0]
    assert cout == C
    M = np.zeros((4 * W * C, W * cout), np.float32)
    for half in (0, 1):
        for wp in range(W):
            for c_in in range(C):
                r = half * (W * C) + wp * C + c_in
                for o in range(cout):
                    M[r, wp * cout + o] = w[o, half * C + c_in, 0, 0]
    return M, np.tile(b, W)


_CONV_ORDER = ("dc1", "dc2", "dc3", "dr1", "dr2", "dr3", "nin")


def _pack_params(params, W, C):
    """Pack all 7 convs into one (4WC, NCOL) weight slab + (1, NCOL) bias row."""
    blocks, biases, offsets = [], [], {}
    off = 0
    for name in _CONV_ORDER:
        w, b = params[name]
        if name == "nin":
            M, brow = _build_nin_matrix(w, b, W, C)
        else:
            M, brow = _build_causal_matrix(w, b, W, C)
        offsets[name] = off
        off += M.shape[1]
        blocks.append(M)
        biases.append(brow)
    w_all = jnp.asarray(np.concatenate(blocks, axis=1))          # (4WC, NCOL)
    b_all = jnp.asarray(np.concatenate(biases)[None, :])         # (1, NCOL)
    return w_all, b_all, offsets


# ------------------------------- host wrapper ---------------------------------

def gated_resnet_block_nhwc(x1, x2, params, h=None, dropout=0.0):
    """NHWC entry point (preferred: no layout traffic at the boundary)."""
    if h is not None or dropout != 0.0:
        raise NotImplementedError(
            "h-conditioning / dropout>0 paths are not implemented in the kernel")
    B, H, W, C = x1.shape
    WC = W * C

    w_all, b_all, offs = _pack_params(params, W, C)
    offs_tuple = tuple(offs[n] for n in _CONV_ORDER)
    kernel = _make_kernel(H, WC, offs_tuple)

    # Free contiguous reshape: NHWC -> (B, H, W*C) lane-packed rows.
    x1f = x1.astype(jnp.float32).reshape(B, H, WC)
    x2f = x2.astype(jnp.float32).reshape(B, H, WC)

    x_spec = pl.BlockSpec((1, H, WC), lambda b: (b, 0, 0))
    w_spec = pl.BlockSpec(w_all.shape, lambda b: (0, 0))     # VMEM-resident weights
    b_spec = pl.BlockSpec(b_all.shape, lambda b: (0, 0))

    c1, c2 = pl.pallas_call(
        kernel,
        out_shape=(jax.ShapeDtypeStruct((B, H, WC), jnp.float32),
                   jax.ShapeDtypeStruct((B, H, WC), jnp.float32)),
        grid=(B,),
        in_specs=[x_spec, x_spec, w_spec, b_spec],
        out_specs=(x_spec, x_spec),
        compiler_params=pltpu.CompilerParams(
            dimension_semantics=("parallel",),       # 2 steps -> both v7x TCs busy
            vmem_limit_bytes=32 * 1024 * 1024),      # footprint ~2 MiB; safe on all chips
    )(x1f, x2f, w_all, b_all)
    return c1.reshape(B, H, W, C), c2.reshape(B, H, W, C)


def gated_resnet_block(x1_nchw, x2_nchw, params, h=None, dropout=0.0):
    """NCHW module-contract wrapper (only layout plumbing around the NHWC path)."""
    to_nhwc = lambda t: jnp.transpose(t, (0, 2, 3, 1))
    c1, c2 = gated_resnet_block_nhwc(to_nhwc(x1_nchw), to_nhwc(x2_nchw), params,
                                     h=h, dropout=dropout)
    to_nchw = lambda t: jnp.transpose(t, (0, 3, 1, 2))
    return to_nchw(c1), to_nchw(c2)


# ----------------------------- parameter setup --------------------------------

def make_conv_params(key, cin, cout, kh, kw):
    """Deterministic weight-norm conv params; returns effective (OIHW weight, bias)."""
    k1, k2, k3 = jax.random.split(key, 3)
    v = 0.1 * jax.random.normal(k1, (cout, cin, kh, kw), jnp.float32)
    g = 1.0 + 0.05 * jax.random.normal(k2, (cout,), jnp.float32)
    b = 0.05 * jax.random.normal(k3, (cout,), jnp.float32)
    norm = jnp.sqrt(jnp.sum(v * v, axis=(1, 2, 3)))
    w = v * (g / norm)[:, None, None, None]        # weight-norm reparametrization
    return w, b


# ---------------------------- pure-JAX reference ------------------------------

def _concat_elu_ref(v):
    return _elu(jnp.concatenate([v, -v], axis=-1))


def ref_forward(x1, x2, params):
    """Reference in NHWC using lax.conv_general_dilated (mirrors the PyTorch code)."""
    C = x1.shape[-1]

    def conv(x, w_oihw, b, pad):
        w_hwio = jnp.transpose(w_oihw, (2, 3, 1, 0))
        y = lax.conv_general_dilated(x, w_hwio, (1, 1), pad,
                                     dimension_numbers=('NHWC', 'HWIO', 'NHWC'))
        return y + b

    DS = ((1, 0), (1, 1))   # top=1 ; left=1,right=1
    DR = ((1, 0), (1, 0))   # top=1 ; left=1
    NN = ((0, 0), (0, 0))

    c1 = conv(_concat_elu_ref(x1), *params["dc1"], DS)
    c1 = conv(_concat_elu_ref(c1), *params["dc2"], DS)
    y1 = conv(_concat_elu_ref(c1), *params["dc3"], DS)
    a1, g1 = y1[..., :C], y1[..., C:]
    c1 = a1 * jax.nn.sigmoid(g1) + x1

    aux = conv(_concat_elu_ref(c1), *params["nin"], NN)
    c2 = conv(_concat_elu_ref(x2), *params["dr1"], DR)
    c2 = conv(_concat_elu_ref(c2), *params["dr2"], DR)
    y2 = conv(_concat_elu_ref(c2 + aux), *params["dr3"], DR)
    a2, g2 = y2[..., :C], y2[..., C:]
    c2 = a2 * jax.nn.sigmoid(g2) + x2
    return c1, c2


# ----------------------------------- main --------------------------------------

if __name__ == "__main__":
    key = jax.random.PRNGKey(0)
    B, C, H, W = 2, 4, 16, 16           # in_channels = 4

    k_x1, k_x2, k_p = jax.random.split(key, 3)
    # NHWC end-to-end (per the perf review: no NCHW<->NHWC relayout traffic).
    x1 = jax.random.normal(k_x1, (B, H, W, C), jnp.float32)
    x2 = jax.random.normal(k_x2, (B, H, W, C), jnp.float32)

    # gain = 2 (concat_elu): conv input channels are 2*C
    conv_defs = {
        "dc1": (2 * C, C, 2, 3),
        "dc2": (2 * C, C, 2, 3),
        "dc3": (2 * C, 2 * C, 2, 3),
        "dr1": (2 * C, C, 2, 2),
        "dr2": (2 * C, C, 2, 2),
        "dr3": (2 * C, 2 * C, 2, 2),
        "nin": (2 * C, C, 1, 1),
    }
    params = {}
    pkeys = jax.random.split(k_p, len(conv_defs))
    for pk, (name, (cin, cout, kh, kw)) in zip(pkeys, conv_defs.items()):
        params[name] = make_conv_params(pk, cin, cout, kh, kw)

    c1, c2 = gated_resnet_block_nhwc(x1, x2, params)
    jax.block_until_ready((c1, c2))

    # correctness check against a pure-JAX lax.conv reference
    r1, r2 = ref_forward(x1, x2, params)
    np.testing.assert_allclose(np.asarray(c1), np.asarray(r1), rtol=1e-4, atol=1e-4)
    np.testing.assert_allclose(np.asarray(c2), np.asarray(r2), rtol=1e-4, atol=1e-4)

    print("KERNEL_OK")
</pallas_src>

<mosaic_0001>
module attributes {stable_mosaic.version = 11 : i64} {
  func.func @kernel(%arg0: i32, %arg1: memref<1x16x64xf32, #tpu.memory_space<vmem>>, %arg2: memref<1x16x64xf32, #tpu.memory_space<vmem>>, %arg3: memref<256x576xf32, #tpu.memory_space<vmem>>, %arg4: memref<1x576xf32, #tpu.memory_space<vmem>>, %arg5: memref<1x16x64xf32, #tpu.memory_space<vmem>>, %arg6: memref<1x16x64xf32, #tpu.memory_space<vmem>>) attributes {dimension_semantics = [#tpu.dimension_semantics<parallel>], iteration_bounds = array<i64: 2>, scalar_prefetch = 0 : i64, scratch_operands = 0 : i64, tpu.core_type = #tpu.core_type<tc>, window_params = [{transform_indices = @transform_0, window_bounds = array<i64: 1, 16, 64>}, {transform_indices = @transform_1, window_bounds = array<i64: 1, 16, 64>}, {pipeline_mode = #tpu.pipeline_mode<synchronous>, transform_indices = @transform_2, window_bounds = array<i64: 256, 576>}, {pipeline_mode = #tpu.pipeline_mode<synchronous>, transform_indices = @transform_3, window_bounds = array<i64: 1, 576>}, {transform_indices = @transform_4, window_bounds = array<i64: 1, 16, 64>}, {transform_indices = @transform_5, window_bounds = array<i64: 1, 16, 64>}]} {
    %c0 = arith.constant 0 : index
    %c0_0 = arith.constant 0 : index
    %c0_1 = arith.constant 0 : index
    %0 = vector.load %arg1[%c0, %c0_0, %c0_1] : memref<1x16x64xf32, #tpu.memory_space<vmem>>, vector<1x16x64xf32>
    %1 = vector.shape_cast %0 : vector<1x16x64xf32> to vector<16x64xf32>
    %c0_2 = arith.constant 0 : index
    %c0_3 = arith.constant 0 : index
    %c0_4 = arith.constant 0 : index
    %2 = vector.load %arg2[%c0_2, %c0_3, %c0_4] : memref<1x16x64xf32, #tpu.memory_space<vmem>>, vector<1x16x64xf32>
    %3 = vector.shape_cast %2 : vector<1x16x64xf32> to vector<16x64xf32>
    %cst = arith.constant 0.000000e+00 : f32
    %4 = vector.broadcast %cst : f32 to vector<16x64xf32>
    %5 = arith.cmpf ogt, %1, %4 : vector<16x64xf32>
    %cst_5 = arith.constant 0.000000e+00 : f32
    %6 = vector.broadcast %cst_5 : f32 to vector<16x64xf32>
    %7 = arith.minimumf %1, %6 : vector<16x64xf32>
    %8 = math.exp %7 : vector<16x64xf32>
    %cst_6 = arith.constant 1.000000e+00 : f32
    %9 = vector.broadcast %cst_6 : f32 to vector<16x64xf32>
    %10 = arith.subf %8, %9 : vector<16x64xf32>
    %11 = arith.select %5, %1, %10 : vector<16x64xi1>, vector<16x64xf32>
    %cst_7 = arith.constant 0.000000e+00 : f32
    %12 = vector.broadcast %cst_7 : f32 to vector<16x64xf32>
    %13 = arith.subf %12, %1 : vector<16x64xf32>
    %cst_8 = arith.constant 0.000000e+00 : f32
    %14 = vector.broadcast %cst_8 : f32 to vector<16x64xf32>
    %15 = arith.cmpf ogt, %13, %14 : vector<16x64xf32>
    %cst_9 = arith.constant 0.000000e+00 : f32
    %16 = vector.broadcast %cst_9 : f32 to vector<16x64xf32>
    %17 = arith.minimumf %13, %16 : vector<16x64xf32>
    %18 = math.exp %17 : vector<16x64xf32>
    %cst_10 = arith.constant 1.000000e+00 : f32
    %19 = vector.broadcast %cst_10 : f32 to vector<16x64xf32>
    %20 = arith.subf %18, %19 : vector<16x64xf32>
    %21 = arith.select %15, %13, %20 : vector<16x64xi1>, vector<16x64xf32>
    %22 = tpu.concatenate %11, %21 in 1 : vector<16x64xf32>, vector<16x64xf32> -> vector<16x128xf32>
    %c1_i32 = arith.constant 1 : i32
    %23 = tpu.dynamic_rotate %22 by %c1_i32 dim 0 : vector<16x128xf32>, i32 -> vector<16x128xf32>
    %24 = tpu.iota {dimensions = array<i32: 0>} : vector<16x128xi32>
    %c0_i32 = arith.constant 0 : i32
    %25 = vector.broadcast %c0_i32 : i32 to vector<16x128xi32>
    %26 = arith.cmpi eq, %24, %25 : vector<16x128xi32>
    %cst_11 = arith.constant 0.000000e+00 : f32
    %27 = vector.broadcast %cst_11 : f32 to vector<16x128xf32>
    %28 = arith.select %26, %27, %23 : vector<16x128xi1>, vector<16x128xf32>
    %29 = tpu.concatenate %22, %28 in 1 : vector<16x128xf32>, vector<16x128xf32> -> vector<16x256xf32>
    %c0_12 = arith.constant 0 : index
    %c0_13 = arith.constant 0 : index
    %30 = vector.load %arg3[%c0_12, %c0_13] : memref<256x576xf32, #tpu.memory_space<vmem>>, vector<256x64xf32>
    %cst_14 = arith.constant dense<0.000000e+00> : vector<16x64xf32>
    %31 = tpu.matmul %29, %30, %cst_14 {dimension_numbers = #tpu.dot_dimension_numbers<[1], [0], [0], [1], [0, 0, 1, 1], [], []>} : vector<16x256xf32>, vector<256x64xf32>, vector<16x64xf32> -> vector<16x64xf32>
    %c0_15 = arith.constant 0 : index
    %c0_16 = arith.constant 0 : index
    %32 = vector.load %arg4[%c0_15, %c0_16] : memref<1x576xf32, #tpu.memory_space<vmem>>, vector<1x64xf32>
    %33 = vector.broadcast %32 : vector<1x64xf32> to vector<16x64xf32>
    %34 = arith.addf %31, %33 : vector<16x64xf32>
    %cst_17 = arith.constant 0.000000e+00 : f32
    %35 = vector.broadcast %cst_17 : f32 to vector<16x64xf32>
    %36 = arith.cmpf ogt, %34, %35 : vector<16x64xf32>
    %cst_18 = arith.constant 0.000000e+00 : f32
    %37 = vector.broadcast %cst_18 : f32 to vector<16x64xf32>
    %38 = arith.minimumf %34, %37 : vector<16x64xf32>
    %39 = math.exp %38 : vector<16x64xf32>
    %cst_19 = arith.constant 1.000000e+00 : f32
    %40 = vector.broadcast %cst_19 : f32 to vector<16x64xf32>
    %41 = arith.subf %39, %40 : vector<16x64xf32>
    %42 = arith.select %36, %34, %41 : vector<16x64xi1>, vector<16x64xf32>
    %cst_20 = arith.constant 0.000000e+00 : f32
    %43 = vector.broadcast %cst_20 : f32 to vector<16x64xf32>
    %44 = arith.subf %43, %34 : vector<16x64xf32>
    %cst_21 = arith.constant 0.000000e+00 : f32
    %45 = vector.broadcast %cst_21 : f32 to vector<16x64xf32>
    %46 = arith.cmpf ogt, %44, %45 : vector<16x64xf32>
    %cst_22 = arith.constant 0.000000e+00 : f32
    %47 = vector.broadcast %cst_22 : f32 to vector<16x64xf32>
    %48 = arith.minimumf %44, %47 : vector<16x64xf32>
    %49 = math.exp %48 : vector<16x64xf32>
    %cst_23 = arith.constant 1.000000e+00 : f32
    %50 = vector.broadcast %cst_23 : f32 to vector<16x64xf32>
    %51 = arith.subf %49, %50 : vector<16x64xf32>
    %52 = arith.select %46, %44, %51 : vector<16x64xi1>, vector<16x64xf32>
    %53 = tpu.concatenate %42, %52 in 1 : vector<16x64xf32>, vector<16x64xf32> -> vector<16x128xf32>
    %c1_i32_24 = arith.constant 1 : i32
    %54 = tpu.dynamic_rotate %53 by %c1_i32_24 dim 0 : vector<16x128xf32>, i32 -> vector<16x128xf32>
    %55 = tpu.iota {dimensions = array<i32: 0>} : vector<16x128xi32>
    %c0_i32_25 = arith.constant 0 : i32
    %56 = vector.broadcast %c0_i32_25 : i32 to vector<16x128xi32>
    %57 = arith.cmpi eq, %55, %56 : vector<16x128xi32>
    %cst_26 = arith.constant 0.000000e+00 : f32
    %58 = vector.broadcast %cst_26 : f32 to vector<16x128xf32>
    %59 = arith.select %57, %58, %54 : vector<16x128xi1>, vector<16x128xf32>
    %60 = tpu.concatenate %53, %59 in 1 : vector<16x128xf32>, vector<16x128xf32> -> vector<16x256xf32>
    %c0_27 = arith.constant 0 : index
    %c64 = arith.constant 64 : index
    %61 = vector.load %arg3[%c0_27, %c64] : memref<256x576xf32, #tpu.memory_space<vmem>>, vector<256x64xf32>
    %cst_28 = arith.constant dense<0.000000e+00> : vector<16x64xf32>
    %62 = tpu.matmul %60, %61, %cst_28 {dimension_numbers = #tpu.dot_dimension_numbers<[1], [0], [0], [1], [0, 0, 1, 1], [], []>} : vector<16x256xf32>, vector<256x64xf32>, vector<16x64xf32> -> vector<16x64xf32>
    %c0_29 = arith.constant 0 : index
    %c64_30 = arith.constant 64 : index
    %63 = vector.load %arg4[%c0_29, %c64_30] : memref<1x576xf32, #tpu.memory_space<vmem>>, vector<1x64xf32>
    %64 = vector.broadcast %63 : vector<1x64xf32> to vector<16x64xf32>
    %65 = arith.addf %62, %64 : vector<16x64xf32>
    %cst_31 = arith.constant 0.000000e+00 : f32
    %66 = vector.broadcast %cst_31 : f32 to vector<16x64xf32>
    %67 = arith.cmpf ogt, %65, %66 : vector<16x64xf32>
    %cst_32 = arith.constant 0.000000e+00 : f32
    %68 = vector.broadcast %cst_32 : f32 to vector<16x64xf32>
    %69 = arith.minimumf %65, %68 : vector<16x64xf32>
    %70 = math.exp %69 : vector<16x64xf32>
    %cst_33 = arith.constant 1.000000e+00 : f32
    %71 = vector.broadcast %cst_33 : f32 to vector<16x64xf32>
    %72 = arith.subf %70, %71 : vector<16x64xf32>
    %73 = arith.select %67, %65, %72 : vector<16x64xi1>, vector<16x64xf32>
    %cst_34 = arith.constant 0.000000e+00 : f32
    %74 = vector.broadcast %cst_34 : f32 to vector<16x64xf32>
    %75 = arith.subf %74, %65 : vector<16x64xf32>
    %cst_35 = arith.constant 0.000000e+00 : f32
    %76 = vector.broadcast %cst_35 : f32 to vector<16x64xf32>
    %77 = arith.cmpf ogt, %75, %76 : vector<16x64xf32>
    %cst_36 = arith.constant 0.000000e+00 : f32
    %78 = vector.broadcast %cst_36 : f32 to vector<16x64xf32>
    %79 = arith.minimumf %75, %78 : vector<16x64xf32>
    %80 = math.exp %79 : vector<16x64xf32>
    %cst_37 = arith.constant 1.000000e+00 : f32
    %81 = vector.broadcast %cst_37 : f32 to vector<16x64xf32>
    %82 = arith.subf %80, %81 : vector<16x64xf32>
    %83 = arith.select %77, %75, %82 : vector<16x64xi1>, vector<16x64xf32>
    %84 = tpu.concatenate %73, %83 in 1 : vector<16x64xf32>, vector<16x64xf32> -> vector<16x128xf32>
    %c1_i32_38 = arith.constant 1 : i32
    %85 = tpu.dynamic_rotate %84 by %c1_i32_38 dim 0 : vector<16x128xf32>, i32 -> vector<16x128xf32>
    %86 = tpu.iota {dimensions = array<i32: 0>} : vector<16x128xi32>
    %c0_i32_39 = arith.constant 0 : i32
    %87 = vector.broadcast %c0_i32_39 : i32 to vector<16x128xi32>
    %88 = arith.cmpi eq, %86, %87 : vector<16x128xi32>
    %cst_40 = arith.constant 0.000000e+00 : f32
    %89 = vector.broadcast %cst_40 : f32 to vector<16x128xf32>
    %90 = arith.select %88, %89, %85 : vector<16x128xi1>, vector<16x128xf32>
    %91 = tpu.concatenate %84, %90 in 1 : vector<16x128xf32>, vector<16x128xf32> -> vector<16x256xf32>
    %c0_41 = arith.constant 0 : index
    %c128 = arith.constant 128 : index
    %92 = vector.load %arg3[%c0_41, %c128] : memref<256x576xf32, #tpu.memory_space<vmem>>, vector<256x128xf32>
    %cst_42 = arith.constant dense<0.000000e+00> : vector<16x128xf32>
    %93 = tpu.matmul %91, %92, %cst_42 {dimension_numbers = #tpu.dot_dimension_numbers<[1], [0], [0], [1], [0, 0, 1, 1], [], []>} : vector<16x256xf32>, vector<256x128xf32>, vector<16x128xf32> -> vector<16x128xf32>
    %c0_43 = arith.constant 0 : index
    %c128_44 = arith.constant 128 : index
    %94 = vector.load %arg4[%c0_43, %c128_44] : memref<1x576xf32, #tpu.memory_space<vmem>>, vector<1x128xf32>
    %95 = vector.broadcast %94 : vector<1x128xf32> to vector<16x128xf32>
    %96 = arith.addf %93, %95 : vector<16x128xf32>
    %97 = vector.extract_strided_slice %96 {offsets = [0, 0], sizes = [16, 64], strides = [1, 1]} : vector<16x128xf32> to vector<16x64xf32>
    %98 = vector.extract_strided_slice %96 {offsets = [0, 64], sizes = [16, 64], strides = [1, 1]} : vector<16x128xf32> to vector<16x64xf32>
    %99 = arith.negf %98 : vector<16x64xf32>
    %100 = math.exp %99 : vector<16x64xf32>
    %cst_45 = arith.constant 1.000000e+00 : f32
    %101 = vector.broadcast %cst_45 : f32 to vector<16x64xf32>
    %102 = arith.addf %101, %100 : vector<16x64xf32>
    %103 = arith.divf %101, %102 : vector<16x64xf32>
    %104 = arith.mulf %97, %103 : vector<16x64xf32>
    %105 = arith.addf %104, %1 : vector<16x64xf32>
    %c0_46 = arith.constant 0 : index
    %c0_47 = arith.constant 0 : index
    %c0_48 = arith.constant 0 : index
    %106 = vector.load %arg5[%c0_46, %c0_47, %c0_48] : memref<1x16x64xf32, #tpu.memory_space<vmem>>, vector<1x16x64xf32>
    %107 = vector.shape_cast %106 : vector<1x16x64xf32> to vector<16x64xf32>
    %108 = vector.shape_cast %105 : vector<16x64xf32> to vector<1x16x64xf32>
    tpu.vector_store %arg5[%c0_46, %c0_47, %c0_48], %108 {strides = array<i32>} : memref<1x16x64xf32, #tpu.memory_space<vmem>>, vector<1x16x64xf32>,
    %cst_49 = arith.constant 0.000000e+00 : f32
    %109 = vector.broadcast %cst_49 : f32 to vector<16x64xf32>
    %110 = arith.cmpf ogt, %105, %109 : vector<16x64xf32>
    %cst_50 = arith.constant 0.000000e+00 : f32
    %111 = vector.broadcast %cst_50 : f32 to vector<16x64xf32>
    %112 = arith.minimumf %105, %111 : vector<16x64xf32>
    %113 = math.exp %112 : vector<16x64xf32>
    %cst_51 = arith.constant 1.000000e+00 : f32
    %114 = vector.broadcast %cst_51 : f32 to vector<16x64xf32>
    %115 = arith.subf %113, %114 : vector<16x64xf32>
    %116 = arith.select %110, %105, %115 : vector<16x64xi1>, vector<16x64xf32>
    %cst_52 = arith.constant 0.000000e+00 : f32
    %117 = vector.broadcast %cst_52 : f32 to vector<16x64xf32>
    %118 = arith.subf %117, %105 : vector<16x64xf32>
    %cst_53 = arith.constant 0.000000e+00 : f32
    %119 = vector.broadcast %cst_53 : f32 to vector<16x64xf32>
    %120 = arith.cmpf ogt, %118, %119 : vector<16x64xf32>
    %cst_54 = arith.constant 0.000000e+00 : f32
    %121 = vector.broadcast %cst_54 : f32 to vector<16x64xf32>
    %122 = arith.minimumf %118, %121 : vector<16x64xf32>
    %123 = math.exp %122 : vector<16x64xf32>
    %cst_55 = arith.constant 1.000000e+00 : f32
    %124 = vector.broadcast %cst_55 : f32 to vector<16x64xf32>
    %125 = arith.subf %123, %124 : vector<16x64xf32>
    %126 = arith.select %120, %118, %125 : vector<16x64xi1>, vector<16x64xf32>
    %127 = tpu.concatenate %116, %126 in 1 : vector<16x64xf32>, vector<16x64xf32> -> vector<16x128xf32>
    %c0_56 = arith.constant 0 : index
    %c512 = arith.constant 512 : index
    %128 = vector.load %arg3[%c0_56, %c512] : memref<256x576xf32, #tpu.memory_space<vmem>>, vector<128x64xf32>
    %cst_57 = arith.constant dense<0.000000e+00> : vector<16x64xf32>
    %129 = tpu.matmul %127, %128, %cst_57 {dimension_numbers = #tpu.dot_dimension_numbers<[1], [0], [0], [1], [0, 0, 1, 1], [], []>} : vector<16x128xf32>, vector<128x64xf32>, vector<16x64xf32> -> vector<16x64xf32>
    %c0_58 = arith.constant 0 : index
    %c512_59 = arith.constant 512 : index
    %130 = vector.load %arg4[%c0_58, %c512_59] : memref<1x576xf32, #tpu.memory_space<vmem>>, vector<1x64xf32>
    %131 = vector.broadcast %130 : vector<1x64xf32> to vector<16x64xf32>
    %132 = arith.addf %129, %131 : vector<16x64xf32>
    %cst_60 = arith.constant 0.000000e+00 : f32
    %133 = vector.broadcast %cst_60 : f32 to vector<16x64xf32>
    %134 = arith.cmpf ogt, %3, %133 : vector<16x64xf32>
    %cst_61 = arith.constant 0.000000e+00 : f32
    %135 = vector.broadcast %cst_61 : f32 to vector<16x64xf32>
    %136 = arith.minimumf %3, %135 : vector<16x64xf32>
    %137 = math.exp %136 : vector<16x64xf32>
    %cst_62 = arith.constant 1.000000e+00 : f32
    %138 = vector.broadcast %cst_62 : f32 to vector<16x64xf32>
    %139 = arith.subf %137, %138 : vector<16x64xf32>
    %140 = arith.select %134, %3, %139 : vector<16x64xi1>, vector<16x64xf32>
    %cst_63 = arith.constant 0.000000e+00 : f32
    %141 = vector.broadcast %cst_63 : f32 to vector<16x64xf32>
    %142 = arith.subf %141, %3 : vector<16x64xf32>
    %cst_64 = arith.constant 0.000000e+00 : f32
    %143 = vector.broadcast %cst_64 : f32 to vector<16x64xf32>
    %144 = arith.cmpf ogt, %142, %143 : vector<16x64xf32>
    %cst_65 = arith.constant 0.000000e+00 : f32
    %145 = vector.broadcast %cst_65 : f32 to vector<16x64xf32>
    %146 = arith.minimumf %142, %145 : vector<16x64xf32>
    %147 = math.exp %146 : vector<16x64xf32>
    %cst_66 = arith.constant 1.000000e+00 : f32
    %148 = vector.broadcast %cst_66 : f32 to vector<16x64xf32>
    %149 = arith.subf %147, %148 : vector<16x64xf32>
    %150 = arith.select %144, %142, %149 : vector<16x64xi1>, vector<16x64xf32>
    %151 = tpu.concatenate %140, %150 in 1 : vector<16x64xf32>, vector<16x64xf32> -> vector<16x128xf32>
    %c1_i32_67 = arith.constant 1 : i32
    %152 = tpu.dynamic_rotate %151 by %c1_i32_67 dim 0 : vector<16x128xf32>, i32 -> vector<16x128xf32>
    %153 = tpu.iota {dimensions = array<i32: 0>} : vector<16x128xi32>
    %c0_i32_68 = arith.constant 0 : i32
    %154 = vector.broadcast %c0_i32_68 : i32 to vector<16x128xi32>
    %155 = arith.cmpi eq, %153, %154 : vector<16x128xi32>
    %cst_69 = arith.constant 0.000000e+00 : f32
    %156 = vector.broadcast %cst_69 : f32 to vector<16x128xf32>
    %157 = arith.select %155, %156, %152 : vector<16x128xi1>, vector<16x128xf32>
    %158 = tpu.concatenate %151, %157 in 1 : vector<16x128xf32>, vector<16x128xf32> -> vector<16x256xf32>
    %c0_70 = arith.constant 0 : index
    %c256 = arith.constant 256 : index
    %159 = vector.load %arg3[%c0_70, %c256] : memref<256x576xf32, #tpu.memory_space<vmem>>, vector<256x64xf32>
    %cst_71 = arith.constant dense<0.000000e+00> : vector<16x64xf32>
    %160 = tpu.matmul %158, %159, %cst_71 {dimension_numbers = #tpu.dot_dimension_numbers<[1], [0], [0], [1], [0, 0, 1, 1], [], []>} : vector<16x256xf32>, vector<256x64xf32>, vector<16x64xf32> -> vector<16x64xf32>
    %c0_72 = arith.constant 0 : index
    %c256_73 = arith.constant 256 : index
    %161 = vector.load %arg4[%c0_72, %c256_73] : memref<1x576xf32, #tpu.memory_space<vmem>>, vector<1x64xf32>
    %162 = vector.broadcast %161 : vector<1x64xf32> to vector<16x64xf32>
    %163 = arith.addf %160, %162 : vector<16x64xf32>
    %cst_74 = arith.constant 0.000000e+00 : f32
    %164 = vector.broadcast %cst_74 : f32 to vector<16x64xf32>
    %165 = arith.cmpf ogt, %163, %164 : vector<16x64xf32>
    %cst_75 = arith.constant 0.000000e+00 : f32
    %166 = vector.broadcast %cst_75 : f32 to vector<16x64xf32>
    %167 = arith.minimumf %163, %166 : vector<16x64xf32>
    %168 = math.exp %167 : vector<16x64xf32>
    %cst_76 = arith.constant 1.000000e+00 : f32
    %169 = vector.broadcast %cst_76 : f32 to vector<16x64xf32>
    %170 = arith.subf %168, %169 : vector<16x64xf32>
    %171 = arith.select %165, %163, %170 : vector<16x64xi1>, vector<16x64xf32>
    %cst_77 = arith.constant 0.000000e+00 : f32
    %172 = vector.broadcast %cst_77 : f32 to vector<16x64xf32>
    %173 = arith.subf %172, %163 : vector<16x64xf32>
    %cst_78 = arith.constant 0.000000e+00 : f32
    %174 = vector.broadcast %cst_78 : f32 to vector<16x64xf32>
    %175 = arith.cmpf ogt, %173, %174 : vector<16x64xf32>
    %cst_79 = arith.constant 0.000000e+00 : f32
    %176 = vector.broadcast %cst_79 : f32 to vector<16x64xf32>
    %177 = arith.minimumf %173, %176 : vector<16x64xf32>
    %178 = math.exp %177 : vector<16x64xf32>
    %cst_80 = arith.constant 1.000000e+00 : f32
    %179 = vector.broadcast %cst_80 : f32 to vector<16x64xf32>
    %180 = arith.subf %178, %179 : vector<16x64xf32>
    %181 = arith.select %175, %173, %180 : vector<16x64xi1>, vector<16x64xf32>
    %182 = tpu.concatenate %171, %181 in 1 : vector<16x64xf32>, vector<16x64xf32> -> vector<16x128xf32>
    %c1_i32_81 = arith.constant 1 : i32
    %183 = tpu.dynamic_rotate %182 by %c1_i32_81 dim 0 : vector<16x128xf32>, i32 -> vector<16x128xf32>
    %184 = tpu.iota {dimensions = array<i32: 0>} : vector<16x128xi32>
    %c0_i32_82 = arith.constant 0 : i32
    %185 = vector.broadcast %c0_i32_82 : i32 to vector<16x128xi32>
    %186 = arith.cmpi eq, %184, %185 : vector<16x128xi32>
    %cst_83 = arith.constant 0.000000e+00 : f32
    %187 = vector.broadcast %cst_83 : f32 to vector<16x128xf32>
    %188 = arith.select %186, %187, %183 : vector<16x128xi1>, vector<16x128xf32>
    %189 = tpu.concatenate %182, %188 in 1 : vector<16x128xf32>, vector<16x128xf32> -> vector<16x256xf32>
    %c0_84 = arith.constant 0 : index
    %c320 = arith.constant 320 : index
    %190 = vector.load %arg3[%c0_84, %c320] : memref<256x576xf32, #tpu.memory_space<vmem>>, vector<256x64xf32>
    %cst_85 = arith.constant dense<0.000000e+00> : vector<16x64xf32>
    %191 = tpu.matmul %189, %190, %cst_85 {dimension_numbers = #tpu.dot_dimension_numbers<[1], [0], [0], [1], [0, 0, 1, 1], [], []>} : vector<16x256xf32>, vector<256x64xf32>, vector<16x64xf32> -> vector<16x64xf32>
    %c0_86 = arith.constant 0 : index
    %c320_87 = arith.constant 320 : index
    %192 = vector.load %arg4[%c0_86, %c320_87] : memref<1x576xf32, #tpu.memory_space<vmem>>, vector<1x64xf32>
    %193 = vector.broadcast %192 : vector<1x64xf32> to vector<16x64xf32>
    %194 = arith.addf %191, %193 : vector<16x64xf32>
    %195 = arith.addf %194, %132 : vector<16x64xf32>
    %cst_88 = arith.constant 0.000000e+00 : f32
    %196 = vector.broadcast %cst_88 : f32 to vector<16x64xf32>
    %197 = arith.cmpf ogt, %195, %196 : vector<16x64xf32>
    %cst_89 = arith.constant 0.000000e+00 : f32
    %198 = vector.broadcast %cst_89 : f32 to vector<16x64xf32>
    %199 = arith.minimumf %195, %198 : vector<16x64xf32>
    %200 = math.exp %199 : vector<16x64xf32>
    %cst_90 = arith.constant 1.000000e+00 : f32
    %201 = vector.broadcast %cst_90 : f32 to vector<16x64xf32>
    %202 = arith.subf %200, %201 : vector<16x64xf32>
    %203 = arith.select %197, %195, %202 : vector<16x64xi1>, vector<16x64xf32>
    %cst_91 = arith.constant 0.000000e+00 : f32
    %204 = vector.broadcast %cst_91 : f32 to vector<16x64xf32>
    %205 = arith.subf %204, %195 : vector<16x64xf32>
    %cst_92 = arith.constant 0.000000e+00 : f32
    %206 = vector.broadcast %cst_92 : f32 to vector<16x64xf32>
    %207 = arith.cmpf ogt, %205, %206 : vector<16x64xf32>
    %cst_93 = arith.constant 0.000000e+00 : f32
    %208 = vector.broadcast %cst_93 : f32 to vector<16x64xf32>
    %209 = arith.minimumf %205, %208 : vector<16x64xf32>
    %210 = math.exp %209 : vector<16x64xf32>
    %cst_94 = arith.constant 1.000000e+00 : f32
    %211 = vector.broadcast %cst_94 : f32 to vector<16x64xf32>
    %212 = arith.subf %210, %211 : vector<16x64xf32>
    %213 = arith.select %207, %205, %212 : vector<16x64xi1>, vector<16x64xf32>
    %214 = tpu.concatenate %203, %213 in 1 : vector<16x64xf32>, vector<16x64xf32> -> vector<16x128xf32>
    %c1_i32_95 = arith.constant 1 : i32
    %215 = tpu.dynamic_rotate %214 by %c1_i32_95 dim 0 : vector<16x128xf32>, i32 -> vector<16x128xf32>
    %216 = tpu.iota {dimensions = array<i32: 0>} : vector<16x128xi32>
    %c0_i32_96 = arith.constant 0 : i32
    %217 = vector.broadcast %c0_i32_96 : i32 to vector<16x128xi32>
    %218 = arith.cmpi eq, %216, %217 : vector<16x128xi32>
    %cst_97 = arith.constant 0.000000e+00 : f32
    %219 = vector.broadcast %cst_97 : f32 to vector<16x128xf32>
    %220 = arith.select %218, %219, %215 : vector<16x128xi1>, vector<16x128xf32>
    %221 = tpu.concatenate %214, %220 in 1 : vector<16x128xf32>, vector<16x128xf32> -> vector<16x256xf32>
    %c0_98 = arith.constant 0 : index
    %c384 = arith.constant 384 : index
    %222 = vector.load %arg3[%c0_98, %c384] : memref<256x576xf32, #tpu.memory_space<vmem>>, vector<256x128xf32>
    %cst_99 = arith.constant dense<0.000000e+00> : vector<16x128xf32>
    %223 = tpu.matmul %221, %222, %cst_99 {dimension_numbers = #tpu.dot_dimension_numbers<[1], [0], [0], [1], [0, 0, 1, 1], [], []>} : vector<16x256xf32>, vector<256x128xf32>, vector<16x128xf32> -> vector<16x128xf32>
    %c0_100 = arith.constant 0 : index
    %c384_101 = arith.constant 384 : index
    %224 = vector.load %arg4[%c0_100, %c384_101] : memref<1x576xf32, #tpu.memory_space<vmem>>, vector<1x128xf32>
    %225 = vector.broadcast %224 : vector<1x128xf32> to vector<16x128xf32>
    %226 = arith.addf %223, %225 : vector<16x128xf32>
    %227 = vector.extract_strided_slice %226 {offsets = [0, 0], sizes = [16, 64], strides = [1, 1]} : vector<16x128xf32> to vector<16x64xf32>
    %228 = vector.extract_strided_slice %226 {offsets = [0, 64], sizes = [16, 64], strides = [1, 1]} : vector<16x128xf32> to vector<16x64xf32>
    %229 = arith.negf %228 : vector<16x64xf32>
    %230 = math.exp %229 : vector<16x64xf32>
    %cst_102 = arith.constant 1.000000e+00 : f32
    %231 = vector.broadcast %cst_102 : f32 to vector<16x64xf32>
    %232 = arith.addf %231, %230 : vector<16x64xf32>
    %233 = arith.divf %231, %232 : vector<16x64xf32>
    %234 = arith.mulf %227, %233 : vector<16x64xf32>
    %235 = arith.addf %234, %3 : vector<16x64xf32>
    %c0_103 = arith.constant 0 : index
    %c0_104 = arith.constant 0 : index
    %c0_105 = arith.constant 0 : index
    %236 = vector.load %arg6[%c0_103, %c0_104, %c0_105] : memref<1x16x64xf32, #tpu.memory_space<vmem>>, vector<1x16x64xf32>
    %237 = vector.shape_cast %236 : vector<1x16x64xf32> to vector<16x64xf32>
    %238 = vector.shape_cast %235 : vector<16x64xf32> to vector<1x16x64xf32>
    tpu.vector_store %arg6[%c0_103, %c0_104, %c0_105], %238 {strides = array<i32>} : memref<1x16x64xf32, #tpu.memory_space<vmem>>, vector<1x16x64xf32>,
    return
  }
  func.func @transform_0(%arg0: i32) -> (i32, i32, i32) {
    %c0_i32 = arith.constant 0 : i32
    %c0_i32_0 = arith.constant 0 : i32
    %c0_i32_1 = arith.constant 0 : i32
    return %arg0, %c0_i32, %c0_i32_0 : i32, i32, i32
  }
  func.func @transform_1(%arg0: i32) -> (i32, i32, i32) {
    %c0_i32 = arith.constant 0 : i32
    %c0_i32_0 = arith.constant 0 : i32
    %c0_i32_1 = arith.constant 0 : i32
    return %arg0, %c0_i32, %c0_i32_0 : i32, i32, i32
  }
  func.func @transform_2(%arg0: i32) -> (i32, i32) {
    %c0_i32 = arith.constant 0 : i32
    %c0_i32_0 = arith.constant 0 : i32
    %c0_i32_1 = arith.constant 0 : i32
    return %c0_i32, %c0_i32_0 : i32, i32
  }
  func.func @transform_3(%arg0: i32) -> (i32, i32) {
    %c0_i32 = arith.constant 0 : i32
    %c0_i32_0 = arith.constant 0 : i32
    %c0_i32_1 = arith.constant 0 : i32
    return %c0_i32, %c0_i32_0 : i32, i32
  }
  func.func @transform_4(%arg0: i32) -> (i32, i32, i32) {
    %c0_i32 = arith.constant 0 : i32
    %c0_i32_0 = arith.constant 0 : i32
    %c0_i32_1 = arith.constant 0 : i32
    return %arg0, %c0_i32, %c0_i32_0 : i32, i32, i32
  }
  func.func @transform_5(%arg0: i32) -> (i32, i32, i32) {
    %c0_i32 = arith.constant 0 : i32
    %c0_i32_0 = arith.constant 0 : i32
    %c0_i32_1 = arith.constant 0 : i32
    return %arg0, %c0_i32, %c0_i32_0 : i32, i32, i32
  }
}

</mosaic_0001>

<llo_original>
// kernel: tpu_custom_call.1
$region0: #{tpu_custom_call.1}
  #allocation0 [shape = 'u32[]', space=smem, size = 0x4, offset = 0x4, fixed_abs, tag = 'smem constant byte address 0x4 - core index']
  #allocation1 [shape = 'u32[144,128]{1,0:T(1,128)}', space=vmem, size = 0x12000, scoped, tag = 'internal scratch']
  %s0 = inlined_call_operand.vmem [shape: f32[2,16,64], index: 0, kind: input, shape index: {}]
  %s1 = inlined_call_operand.vmem [shape: f32[2,16,64], index: 1, kind: input, shape index: {}]
  %s2 = inlined_call_operand.vmem [shape: f32[256,576], index: 2, kind: input, shape index: {}]
  %s3 = inlined_call_operand.vmem [shape: f32[1,576], index: 3, kind: input, shape index: {}]
  %s4 = inlined_call_operand.hbm [shape: f32[2,16,64], index: 4, kind: output, shape index: {0}]
  %s5 = inlined_call_operand.hbm [shape: f32[2,16,64], index: 5, kind: output, shape index: {1}]
  %6 = xla_tuple %s4, %s5
  %s7 = sld [smem:[#allocation0]]
  $region57: #{tpu_custom_call.1} parent=0
    _
  %s9 = ssub.s32 1, %s7
  %s10 = scalar_select 0, %s9, %s7
  $region1: #{tpu_custom_call.1} parent=0
    #allocation2 [shape = 'u8[16384]{0}', space=vmem, size = 0x4000, scoped, tag = 'output window, operand 0']
    #allocation3 [shape = 's32[2]{0}', space=sflag, size = 0x8, scoped, tag = 'scoped memory for tpu_custom_call.1']
    #allocation4 [shape = 'u8[16384]{0}', space=vmem, size = 0x4000, scoped, tag = 'output window, operand 1']
    #allocation5 [shape = 's32[2]{0}', space=sflag, size = 0x8, scoped, tag = 'scoped memory for tpu_custom_call.1']
    %11 = vsyncpa [#allocation3], 0
    %s12 = scalar_lea.sflag [#allocation3], 1
    %13 = vsyncpa %s12, 0
    %14 = vsyncpa [#allocation5], 0
    %s15 = scalar_lea.sflag [#allocation5], 1
    %16 = vsyncpa %s15, 0
    loop: start=0, step=1, limit=4
    $region2: #{tpu_custom_call.1} parent=1 // loop_pre_header
      _
    $region3: #{tpu_custom_call.1} parent=1 // loop_header
      %s18 = sphi 0, %s22
      %p19 = scmp.ge.s32.totalorder %s18, 4
      %s28 = sphi 0, %s30
      %s31 = sphi 0, %s28
      %s32 = sphi 0, %s31
      %s48 = sphi 0, %s32
      %s54 = sphi 0, %s56
      %s57 = sphi 0, %s54
      %s58 = sphi 0, %s57
      %s74 = sphi 0, %s58
      %s78 = sphi 0, %s78
      %s80 = sphi 0, %s78
      %s81 = sphi 0, %s80
      %s95 = sphi 0, %s81
      %s99 = sphi 0, %s99
      %s101 = sphi 0, %s99
      %s102 = sphi 0, %s101
      %s116 = sphi 0, %s102
      %s122 = sphi 0, %s124
      %s125 = sphi 0, %s122
      %s126 = sphi 0, %s125
      %s142 = sphi 0, %s126
      %s148 = sphi 0, %s150
      %s151 = sphi 0, %s148
      %s152 = sphi 0, %s151
      %s168 = sphi 0, %s152
    $region4: #{tpu_custom_call.1} parent=1 // loop_header_branch
      %21 = sbr.rel (%p19) target = $region8
    $region5: #{tpu_custom_call.1} parent=1 // loop_body
      %s23 = ssub.s32 %s18, 1
      %s24 = ssub.s32 %s18, 2
      %s25 = sadd.s32 %s18, 1
      %s26 = ssub.s32 %s18, %s25
      %p27 = scmp.eq.s32.totalorder %s26, 0
      %s29 = sadd.s32 %s28, 1
      %s30 = scalar_select %p27, %s28, %s29
      %p33 = pneg %p27
      %p34 = scmp.eq.s32.totalorder %s18, 1
      %p35 = por %p33, %p34
      %p36 = scmp.ne.s32.totalorder %s28, %s31
      %p37 = scmp.eq.s32.totalorder %s18, 0
      %p38 = por %p36, %p37
      %p39 = scmp.ne.s32.totalorder %s28, %s31
      %p40 = scmp.eq.s32.totalorder %s23, 1
      %p41 = por %p39, %p40
      %p42 = scmp.ne.s32.totalorder %s31, %s32
      %p43 = scmp.eq.s32.totalorder %s23, 0
      %p44 = por %p42, %p43
      %p45 = scmp.ne.s32.totalorder %s31, %s32
      %p46 = scmp.eq.s32.totalorder %s24, 1
      %p47 = por %p45, %p46
      %p49 = scmp.ne.s32.totalorder %s32, %s48
      %p50 = scmp.eq.s32.totalorder %s24, 0
      %p51 = por %p49, %p50
      %s52 = ssub.s32 %s18, %s25
      %p53 = scmp.eq.s32.totalorder %s52, 0
      %s55 = sadd.s32 %s54, 1
      %s56 = scalar_select %p53, %s54, %s55
      %p59 = pneg %p53
      %p60 = scmp.eq.s32.totalorder %s18, 1
      %p61 = por %p59, %p60
      %p62 = scmp.ne.s32.totalorder %s54, %s57
      %p63 = scmp.eq.s32.totalorder %s18, 0
      %p64 = por %p62, %p63
      %p65 = scmp.ne.s32.totalorder %s54, %s57
      %p66 = scmp.eq.s32.totalorder %s23, 1
      %p67 = por %p65, %p66
      %p68 = scmp.ne.s32.totalorder %s57, %s58
      %p69 = scmp.eq.s32.totalorder %s23, 0
      %p70 = por %p68, %p69
      %p71 = scmp.ne.s32.totalorder %s57, %s58
      %p72 = scmp.eq.s32.totalorder %s24, 1
      %p73 = por %p71, %p72
      %p75 = scmp.ne.s32.totalorder %s58, %s74
      %p76 = scmp.eq.s32.totalorder %s24, 0
      %p77 = por %p75, %p76
      %s79 = sadd.s32 %s78, 1
      %p82 = scmp.eq.s32.totalorder %s18, 1
      %p83 = scmp.ne.s32.totalorder %s78, %s80
      %p84 = scmp.eq.s32.totalorder %s18, 0
      %p85 = por %p83, %p84
      %p86 = scmp.ne.s32.totalorder %s78, %s80
      %p87 = scmp.eq.s32.totalorder %s23, 1
      %p88 = por %p86, %p87
      %p89 = scmp.ne.s32.totalorder %s80, %s81
      %p90 = scmp.eq.s32.totalorder %s23, 0
      %p91 = por %p89, %p90
      %p92 = scmp.ne.s32.totalorder %s80, %s81
      %p93 = scmp.eq.s32.totalorder %s24, 1
      %p94 = por %p92, %p93
      %p96 = scmp.ne.s32.totalorder %s81, %s95
      %p97 = scmp.eq.s32.totalorder %s24, 0
      %p98 = por %p96, %p97
      %s100 = sadd.s32 %s99, 1
      %p103 = scmp.eq.s32.totalorder %s18, 1
      %p104 = scmp.ne.s32.totalorder %s99, %s101
      %p105 = scmp.eq.s32.totalorder %s18, 0
      %p106 = por %p104, %p105
      %p107 = scmp.ne.s32.totalorder %s99, %s101
      %p108 = scmp.eq.s32.totalorder %s23, 1
      %p109 = por %p107, %p108
      %p110 = scmp.ne.s32.totalorder %s101, %s102
      %p111 = scmp.eq.s32.totalorder %s23, 0
      %p112 = por %p110, %p111
      %p113 = scmp.ne.s32.totalorder %s101, %s102
      %p114 = scmp.eq.s32.totalorder %s24, 1
      %p115 = por %p113, %p114
      %p117 = scmp.ne.s32.totalorder %s102, %s116
      %p118 = scmp.eq.s32.totalorder %s24, 0
      %p119 = por %p117, %p118
      %s120 = ssub.s32 %s18, %s25
      %p121 = scmp.eq.s32.totalorder %s120, 0
      %s123 = sadd.s32 %s122, 1
      %s124 = scalar_select %p121, %s122, %s123
      %p127 = pneg %p121
      %p128 = scmp.eq.s32.totalorder %s18, 1
      %p129 = por %p127, %p128
      %p130 = scmp.ne.s32.totalorder %s122, %s125
      %p131 = scmp.eq.s32.totalorder %s18, 0
      %p132 = por %p130, %p131
      %p133 = scmp.ne.s32.totalorder %s122, %s125
      %p134 = scmp.eq.s32.totalorder %s23, 1
      %p135 = por %p133, %p134
      %p136 = scmp.ne.s32.totalorder %s125, %s126
      %p137 = scmp.eq.s32.totalorder %s23, 0
      %p138 = por %p136, %p137
      %p139 = scmp.ne.s32.totalorder %s125, %s126
      %p140 = scmp.eq.s32.totalorder %s24, 1
      %p141 = por %p139, %p140
      %p143 = scmp.ne.s32.totalorder %s126, %s142
      %p144 = scmp.eq.s32.totalorder %s24, 0
      %p145 = por %p143, %p144
      %s146 = ssub.s32 %s18, %s25
      %p147 = scmp.eq.s32.totalorder %s146, 0
      %s149 = sadd.s32 %s148, 1
      %s150 = scalar_select %p147, %s148, %s149
      %p153 = pneg %p147
      %p154 = scmp.eq.s32.totalorder %s18, 1
      %p155 = por %p153, %p154
      %p156 = scmp.ne.s32.totalorder %s148, %s151
      %p157 = scmp.eq.s32.totalorder %s18, 0
      %p158 = por %p156, %p157
      %p159 = scmp.ne.s32.totalorder %s148, %s151
      %p160 = scmp.eq.s32.totalorder %s23, 1
      %p161 = por %p159, %p160
      %p162 = scmp.ne.s32.totalorder %s151, %s152
      %p163 = scmp.eq.s32.totalorder %s23, 0
      %p164 = por %p162, %p163
      %p165 = scmp.ne.s32.totalorder %s151, %s152
      %p166 = scmp.eq.s32.totalorder %s24, 1
      %p167 = por %p165, %p166
      %p169 = scmp.ne.s32.totalorder %s152, %s168
      %p170 = scmp.eq.s32.totalorder %s24, 0
      %p171 = por %p169, %p170
      %p172 = scmp.le.s32.totalorder 1, %s18
      %p173 = scmp.lt.s32.totalorder %s18, 3
      %p174 = pnand %p172, %p173
      %p175 = pneg %p174
      // Predicated region
      $region9: #{tpu_custom_call.1} parent=5 // pred_check
        _
      $region10: #{tpu_custom_call.1} parent=5 // pred_check_branch
        %177 = sbr.rel (%p174) target = $region12
      $region11: #{tpu_custom_call.1} parent=5 // pred_region
        %s178 = ssub.s32 %s18, 1
        // Predicated region
        $region13: #{tpu_custom_call.1} parent=11 // pred_check
          %p179 = pneg %p91
        $region14: #{tpu_custom_call.1} parent=11 // pred_check_branch
          %181 = sbr.rel (%p179) target = $region16
        $region15: #{tpu_custom_call.1} parent=11 // pred_region
          _
        $region16: #{tpu_custom_call.1} parent=11 // pred_fallthru
          _
        // Predicated region
        $region17: #{tpu_custom_call.1} parent=11 // pred_check
          %p182 = pneg %p112
        $region18: #{tpu_custom_call.1} parent=11 // pred_check_branch
          %184 = sbr.rel (%p182) target = $region20
        $region19: #{tpu_custom_call.1} parent=11 // pred_region
          _
        $region20: #{tpu_custom_call.1} parent=11 // pred_fallthru
          _
      $region12: #{tpu_custom_call.1} parent=5 // pred_fallthru
        _
      %p185 = scmp.lt.s32.totalorder %s18, 2
      // Predicated region
      $region21: #{tpu_custom_call.1} parent=5 // pred_check
        %p186 = pneg %p185
      $region22: #{tpu_custom_call.1} parent=5 // pred_check_branch
        %188 = sbr.rel (%p186) target = $region24
      $region23: #{tpu_custom_call.1} parent=5 // pred_region
        // Predicated region
        $region25: #{tpu_custom_call.1} parent=23 // pred_check
          %p189 = pneg %p38
        $region26: #{tpu_custom_call.1} parent=23 // pred_check_branch
          %191 = sbr.rel (%p189) target = $region28
        $region27: #{tpu_custom_call.1} parent=23 // pred_region
          %p192 = scmp.lt.s32.totalorder %s18, 1
          %s193 = scalar_select %p192, %s18, 1
          %s194 = smul.addr %s193, 2
          %s195 = smul.addr %s194, 8
          %s196 = scalar_lea.vmem %s0, %s195
        $region28: #{tpu_custom_call.1} parent=23 // pred_fallthru
          _
        // Predicated region
        $region29: #{tpu_custom_call.1} parent=23 // pred_check
          %p197 = pneg %p64
        $region30: #{tpu_custom_call.1} parent=23 // pred_check_branch
          %199 = sbr.rel (%p197) target = $region32
        $region31: #{tpu_custom_call.1} parent=23 // pred_region
          %p200 = scmp.lt.s32.totalorder %s18, 1
          %s201 = scalar_select %p200, %s18, 1
          %s202 = smul.addr %s201, 2
          %s203 = smul.addr %s202, 8
          %s204 = scalar_lea.vmem %s1, %s203
        $region32: #{tpu_custom_call.1} parent=23 // pred_fallthru
          _
      $region24: #{tpu_custom_call.1} parent=5 // pred_fallthru
        _
      %p205 = scmp.le.s32.totalorder 1, %s18
      %p206 = scmp.lt.s32.totalorder %s18, 3
      %p207 = pnand %p205, %p206
      %p208 = pneg %p207
      // Predicated region
      $region33: #{tpu_custom_call.1} parent=5 // pred_check
        _
      $region34: #{tpu_custom_call.1} parent=5 // pred_check_branch
        %210 = sbr.rel (%p207) target = $region36
      $region35: #{tpu_custom_call.1} parent=5 // pred_region
        %s211 = ssub.s32 %s18, 1
        %p212 = scmp.lt.s32.totalorder %s23, 1
        %s213 = scalar_select %p212, %s23, 1
        %s214 = smul.addr %s213, 2
        %s215 = smul.addr %s214, 8
        %s216 = scalar_lea.vmem %s0, %s215
        %p217 = pneg %p44
        %p218 = pneg %p41
        %p219 = scmp.lt.s32.totalorder %s23, 1
        %s220 = scalar_select %p219, %s23, 1
        %s221 = smul.addr %s220, 2
        %s222 = smul.addr %s221, 8
        %s223 = scalar_lea.vmem %s1, %s222
        %p224 = pneg %p70
        %p225 = pneg %p67
        %p226 = pneg %p91
        %p227 = pneg %p88
        %p228 = pneg %p112
        %p229 = pneg %p109
        %p230 = pneg %p138
        %p231 = pneg %p135
        %s232 = sand.u32 %s125, 1
        %s233 = scalar_lea.sflag [#allocation3], %s232
        %s234 = sand.u32 %s125, 1
        %s235 = smul.addr %s234, 16
        %s236 = scalar_lea.vmem [#allocation2], %s235
        %p237 = pneg %p164
        %p238 = pneg %p161
        %s239 = sand.u32 %s151, 1
        %s240 = scalar_lea.sflag [#allocation5], %s239
        %s241 = sand.u32 %s151, 1
        %s242 = smul.addr %s241, 16
        %s243 = scalar_lea.vmem [#allocation4], %s242
        %p244 = scmp.lt.s32.totalorder %s23, 1
        %s245 = scalar_select %p244, %s23, 1
        %s246 = smul.addr %s245, 2
        %s247 = smul.addr %s246, 8
        %s248 = scalar_lea.vmem %s0, %s247
        %p249 = scmp.lt.s32.totalorder %s23, 1
        %s250 = scalar_select %p249, %s23, 1
        %s251 = smul.addr %s250, 2
        %s252 = smul.addr %s251, 8
        %s253 = scalar_lea.vmem %s1, %s252
        %v254 = vld [vmem:[%s248] sm:$0xff]
        %v255 = vld [vmem:[%s248 + $0x8] sm:$0xff]
        %v256 = vld [vmem:[%s253] sm:$0xff]
        %v257 = vld [vmem:[%s253 + $0x8] sm:$0xff]
        %vm258 = vcmp.gt.f32.partialorder %v254, 0.0
        %vm259 = vcmp.gt.f32.partialorder %v255, 0.0
        %v260 = vmin.f32 %v254, 0.0
        %v261 = vmin.f32 %v255, 0.0
        %v262 = vmul.f32 %v260, 1.442695
        %v263 = vpow.pop %v262
        %v264 = vmul.f32 %v261, 1.442695
        %v265 = vpow.pop %v264
        %v266 = vsub.f32 %v263, 1.0
        %v267 = vsub.f32 %v265, 1.0
        %v268 = vsel %vm258, %v254, %v266
        %v269 = vsel %vm259, %v255, %v267
        %v270 = vsub.f32 0.0, %v254
        %v271 = vsub.f32 0.0, %v255
        %vm272 = vcmp.gt.f32.partialorder %v270, 0.0
        %vm273 = vcmp.gt.f32.partialorder %v271, 0.0
        %v274 = vmin.f32 %v270, 0.0
        %v275 = vmin.f32 %v271, 0.0
        %v276 = vmul.f32 %v274, 1.442695
        %v277 = vpow.pop %v276
        %v278 = vmul.f32 %v275, 1.442695
        %v279 = vpow.pop %v278
        %v280 = vsub.f32 %v277, 1.0
        %v281 = vsub.f32 %v279, 1.0
        %v282 = vsel %vm272, %v270, %v280
        %v283 = vsel %vm273, %v271, %v281
        %286 = vrot.lane.b32.xlu0 %v282, 64
        %v287 = vpop.permute.xlu0 %286
        %288 = vrot.lane.b32.xlu0 %v283, 64
        %v289 = vpop.permute.xlu0 %288
        %vm292 = vcmask 523264
        %v293 = vsel %vm292, %v268, %v287
        %v294 = vsel %vm292, %v269, %v289
        %v295 = vrot.slane %v293, 7
        %v296 = vrot.slane %v294, 7
        %v297 = vlaneseq
        %v298 = vshrl.u32 %v297, 7
        %vm299 = vcmp.lt.s32.totalorder %v298, 1
        %v300 = vsel %vm299, %v295, %v296
        %v301 = vsel %vm299, %v296, %v295
        %v302 = vadd.s32 %v298, 8
        %vm303 = vcmp.eq.s32.totalorder %v298, 0
        %vm304 = vcmp.eq.s32.totalorder %v302, 0
        %v305 = vsel %vm303, 0.0, %v301
        %v306 = vsel %vm304, 0.0, %v300
        %v307 = vld [vmem:[%s2] sm:$0xff]
        %v308 = vld [vmem:[%s2 + $0x28] sm:$0xff]
        %v309 = vld [vmem:[%s2 + $0x50] sm:$0xff]
        %v310 = vld [vmem:[%s2 + $0x78] sm:$0xff]
        %v311 = vld [vmem:[%s2 + $0xa0] sm:$0xff]
        %v312 = vld [vmem:[%s2 + $0xc8] sm:$0xff]
        %v313 = vld [vmem:[%s2 + $0xf0] sm:$0xff]
        %v314 = vld [vmem:[%s2 + $0x118] sm:$0xff]
        %v315 = vld [vmem:[%s2 + $0x140] sm:$0xff]
        %v316 = vld [vmem:[%s2 + $0x168] sm:$0xff]
        %v317 = vld [vmem:[%s2 + $0x190] sm:$0xff]
        %v318 = vld [vmem:[%s2 + $0x1b8] sm:$0xff]
        %v319 = vld [vmem:[%s2 + $0x1e0] sm:$0xff]
        %v320 = vld [vmem:[%s2 + $0x208] sm:$0xff]
        %v321 = vld [vmem:[%s2 + $0x230] sm:$0xff]
        %v322 = vld [vmem:[%s2 + $0x258] sm:$0xff]
        %v323 = vld [vmem:[%s2 + $0x280] sm:$0xff]
        %v324 = vld [vmem:[%s2 + $0x2a8] sm:$0xff]
        %v325 = vld [vmem:[%s2 + $0x2d0] sm:$0xff]
        %v326 = vld [vmem:[%s2 + $0x2f8] sm:$0xff]
        %v327 = vld [vmem:[%s2 + $0x320] sm:$0xff]
        %v328 = vld [vmem:[%s2 + $0x348] sm:$0xff]
        %v329 = vld [vmem:[%s2 + $0x370] sm:$0xff]
        %v330 = vld [vmem:[%s2 + $0x398] sm:$0xff]
        %v331 = vld [vmem:[%s2 + $0x3c0] sm:$0xff]
        %v332 = vld [vmem:[%s2 + $0x3e8] sm:$0xff]
        %v333 = vld [vmem:[%s2 + $0x410] sm:$0xff]
        %v334 = vld [vmem:[%s2 + $0x438] sm:$0xff]
        %v335 = vld [vmem:[%s2 + $0x460] sm:$0xff]
        %v336 = vld [vmem:[%s2 + $0x488] sm:$0xff]
        %v337 = vld [vmem:[%s2 + $0x4b0] sm:$0xff]
        %v338 = vld [vmem:[%s2 + $0x4d8] sm:$0xff]
        %v339 = vld [vmem:[%s3] sm:$0x1]
        %v341 = vlaneseq
        %v342 = vshrl.u32 %v341, 7
        %v343 = vsub.s32 0, %v342
        %v344 = vrot.slane %v339, %v343
        %346 = vmatprep.subr.mxu0 0.0
        %347 = vmatpush1.msra.mxu0 %v307
        %348 = vmatprep.subr.mxu0 0.0
        %349 = vmatpush1.msra.mxu0 %v308
        %350 = vmatprep.subr.mxu0 0.0
        %351 = vmatpush1.msra.mxu0 %v309
        %352 = vmatprep.subr.mxu0 0.0
        %353 = vmatpush1.msra.mxu0 %v310
        %354 = vmatprep.subr.mxu0 0.0
        %355 = vmatpush1.msra.mxu0 %v311
        %356 = vmatprep.subr.mxu0 0.0
        %357 = vmatpush1.msra.mxu0 %v312
        %358 = vmatprep.subr.mxu0 0.0
        %359 = vmatpush1.msra.mxu0 %v313
        %360 = vmatprep.subr.mxu0 0.0
        %361 = vmatpush1.msra.mxu0 %v314
        %362 = vmatprep.subr.mxu0 0.0
        %363 = vmatpush1.msra.mxu0 %v315
        %364 = vmatprep.subr.mxu0 0.0
        %365 = vmatpush1.msra.mxu0 %v316
        %366 = vmatprep.subr.mxu0 0.0
        %367 = vmatpush1.msra.mxu0 %v317
        %368 = vmatprep.subr.mxu0 0.0
        %369 = vmatpush1.msra.mxu0 %v318
        %370 = vmatprep.subr.mxu0 0.0
        %371 = vmatpush1.msra.mxu0 %v319
        %372 = vmatprep.subr.mxu0 0.0
        %373 = vmatpush1.msra.mxu0 %v320
        %374 = vmatprep.subr.mxu0 0.0
        %375 = vmatpush1.msra.mxu0 %v321
        %376 = vmatprep.subr.mxu0 0.0
        %377 = vmatpush1.msra.mxu0 %v322
        %378 = vmatprep.subr.mxu0 0.0
        %379 = vmatpush1.msra.mxu0 %v323
        %380 = vmatprep.subr.mxu0 0.0
        %381 = vmatpush1.msra.mxu0 %v324
        %382 = vmatprep.subr.mxu0 0.0
        %383 = vmatpush1.msra.mxu0 %v325
        %384 = vmatprep.subr.mxu0 0.0
        %385 = vmatpush1.msra.mxu0 %v326
        %386 = vmatprep.subr.mxu0 0.0
        %387 = vmatpush1.msra.mxu0 %v327
        %388 = vmatprep.subr.mxu0 0.0
        %389 = vmatpush1.msra.mxu0 %v328
        %390 = vmatprep.subr.mxu0 0.0
        %391 = vmatpush1.msra.mxu0 %v329
        %392 = vmatprep.subr.mxu0 0.0
        %393 = vmatpush1.msra.mxu0 %v330
        %394 = vmatprep.subr.mxu0 0.0
        %395 = vmatpush1.msra.mxu0 %v331
        %396 = vmatprep.subr.mxu0 0.0
        %397 = vmatpush1.msra.mxu0 %v332
        %398 = vmatprep.subr.mxu0 0.0
        %399 = vmatpush1.msra.mxu0 %v333
        %400 = vmatprep.subr.mxu0 0.0
        %401 = vmatpush1.msra.mxu0 %v334
        %402 = vmatprep.subr.mxu0 0.0
        %403 = vmatpush1.msra.mxu0 %v335
        %404 = vmatprep.subr.mxu0 0.0
        %405 = vmatpush1.msra.mxu0 %v336
        %406 = vmatprep.subr.mxu0 0.0
        %407 = vmatpush1.msra.mxu0 %v337
        %408 = vmatprep.subr.mxu0 0.0
        %409 = vmatpush1.msra.mxu0 %v338
        %410 = vmatprep.mubr.f32.mxu0 %v305
        %411 = vmatmul.mubr.f32.gmra.mrb[0].mxu0 %v293
        %v412 = vpop.f32.mrb[0].mxu0
        %v413 = vadd.f32 %v344, %v412
        %v414 = vpop.f32.mrb[0].mxu0
        %415 = vmatprep.mubr.f32.mxu0 %v306
        %416 = vmatmul.mubr.f32.gmra.mrb[0].mxu0 %v294
        %v417 = vpop.f32.mrb[0].mxu0
        %v418 = vadd.f32 %v344, %v417
        %v419 = vpop.f32.mrb[0].mxu0
        %420 = vdwg.mxu0
        %vm421 = vcmp.gt.f32.partialorder %v413, 0.0
        %vm422 = vcmp.gt.f32.partialorder %v418, 0.0
        %v423 = vmin.f32 %v413, 0.0
        %v424 = vmin.f32 %v418, 0.0
        %v425 = vmul.f32 %v423, 1.442695
        %v426 = vpow.pop %v425
        %v427 = vmul.f32 %v424, 1.442695
        %v428 = vpow.pop %v427
        %v429 = vsub.f32 %v426, 1.0
        %v430 = vsub.f32 %v428, 1.0
        %v431 = vsel %vm421, %v413, %v429
        %v432 = vsel %vm422, %v418, %v430
        %v433 = vsub.f32 0.0, %v413
        %v434 = vsub.f32 0.0, %v418
        %vm435 = vcmp.gt.f32.partialorder %v433, 0.0
        %vm436 = vcmp.gt.f32.partialorder %v434, 0.0
        %v437 = vmin.f32 %v433, 0.0
        %v438 = vmin.f32 %v434, 0.0
        %v439 = vmul.f32 %v437, 1.442695
        %v440 = vpow.pop %v439
        %v441 = vmul.f32 %v438, 1.442695
        %v442 = vpow.pop %v441
        %v443 = vsub.f32 %v440, 1.0
        %v444 = vsub.f32 %v442, 1.0
        %v445 = vsel %vm435, %v433, %v443
        %v446 = vsel %vm436, %v434, %v444
        %449 = vrot.lane.b32.xlu0 %v445, 64
        %v450 = vpop.permute.xlu0 %449
        %451 = vrot.lane.b32.xlu0 %v446, 64
        %v452 = vpop.permute.xlu0 %451
        %v455 = vsel %vm292, %v431, %v450
        %v456 = vsel %vm292, %v432, %v452
        %v457 = vrot.slane %v455, 7
        %v458 = vrot.slane %v456, 7
        %v459 = vsel %vm299, %v457, %v458
        %v460 = vsel %vm299, %v458, %v457
        %v461 = vsel %vm303, 0.0, %v460
        %v462 = vsel %vm304, 0.0, %v459
        %495 = vrot.lane.b32.xlu0 %v307, 64
        %v496 = vpop.permute.xlu0 %495
        %497 = vrot.lane.b32.xlu0 %v308, 64
        %v498 = vpop.permute.xlu0 %497
        %499 = vrot.lane.b32.xlu0 %v309, 64
        %v500 = vpop.permute.xlu0 %499
        %501 = vrot.lane.b32.xlu0 %v310, 64
        %v502 = vpop.permute.xlu0 %501
        %503 = vrot.lane.b32.xlu0 %v311, 64
        %v504 = vpop.permute.xlu0 %503
        %505 = vrot.lane.b32.xlu0 %v312, 64
        %v506 = vpop.permute.xlu0 %505
        %507 = vrot.lane.b32.xlu0 %v313, 64
        %v508 = vpop.permute.xlu0 %507
        %509 = vrot.lane.b32.xlu0 %v314, 64
        %v510 = vpop.permute.xlu0 %509
        %511 = vrot.lane.b32.xlu0 %v315, 64
        %v512 = vpop.permute.xlu0 %511
        %513 = vrot.lane.b32.xlu0 %v316, 64
        %v514 = vpop.permute.xlu0 %513
        %515 = vrot.lane.b32.xlu0 %v317, 64
        %v516 = vpop.permute.xlu0 %515
        %517 = vrot.lane.b32.xlu0 %v318, 64
        %v518 = vpop.permute.xlu0 %517
        %519 = vrot.lane.b32.xlu0 %v319, 64
        %v520 = vpop.permute.xlu0 %519
        %521 = vrot.lane.b32.xlu0 %v320, 64
        %v522 = vpop.permute.xlu0 %521
        %523 = vrot.lane.b32.xlu0 %v321, 64
        %v524 = vpop.permute.xlu0 %523
        %525 = vrot.lane.b32.xlu0 %v322, 64
        %v526 = vpop.permute.xlu0 %525
        %527 = vrot.lane.b32.xlu0 %v323, 64
        %v528 = vpop.permute.xlu0 %527
        %529 = vrot.lane.b32.xlu0 %v324, 64
        %v530 = vpop.permute.xlu0 %529
        %531 = vrot.lane.b32.xlu0 %v325, 64
        %v532 = vpop.permute.xlu0 %531
        %533 = vrot.lane.b32.xlu0 %v326, 64
        %v534 = vpop.permute.xlu0 %533
        %535 = vrot.lane.b32.xlu0 %v327, 64
        %v536 = vpop.permute.xlu0 %535
        %537 = vrot.lane.b32.xlu0 %v328, 64
        %v538 = vpop.permute.xlu0 %537
        %539 = vrot.lane.b32.xlu0 %v329, 64
        %v540 = vpop.permute.xlu0 %539
        %541 = vrot.lane.b32.xlu0 %v330, 64
        %v542 = vpop.permute.xlu0 %541
        %543 = vrot.lane.b32.xlu0 %v331, 64
        %v544 = vpop.permute.xlu0 %543
        %545 = vrot.lane.b32.xlu0 %v332, 64
        %v546 = vpop.permute.xlu0 %545
        %547 = vrot.lane.b32.xlu0 %v333, 64
        %v548 = vpop.permute.xlu0 %547
        %549 = vrot.lane.b32.xlu0 %v334, 64
        %v550 = vpop.permute.xlu0 %549
        %551 = vrot.lane.b32.xlu0 %v335, 64
        %v552 = vpop.permute.xlu0 %551
        %553 = vrot.lane.b32.xlu0 %v336, 64
        %v554 = vpop.permute.xlu0 %553
        %555 = vrot.lane.b32.xlu0 %v337, 64
        %v556 = vpop.permute.xlu0 %555
        %557 = vrot.lane.b32.xlu0 %v338, 64
        %v558 = vpop.permute.xlu0 %557
        %591 = vrot.lane.b32.xlu0 %v344, 64
        %v592 = vpop.permute.xlu0 %591
        %594 = vmatprep.subr.mxu0 0.0
        %595 = vmatpush1.msra.mxu0 %v496
        %596 = vmatprep.subr.mxu0 0.0
        %597 = vmatpush1.msra.mxu0 %v498
        %598 = vmatprep.subr.mxu0 0.0
        %599 = vmatpush1.msra.mxu0 %v500
        %600 = vmatprep.subr.mxu0 0.0
        %601 = vmatpush1.msra.mxu0 %v502
        %602 = vmatprep.subr.mxu0 0.0
        %603 = vmatpush1.msra.mxu0 %v504
        %604 = vmatprep.subr.mxu0 0.0
        %605 = vmatpush1.msra.mxu0 %v506
        %606 = vmatprep.subr.mxu0 0.0
        %607 = vmatpush1.msra.mxu0 %v508
        %608 = vmatprep.subr.mxu0 0.0
        %609 = vmatpush1.msra.mxu0 %v510
        %610 = vmatprep.subr.mxu0 0.0
        %611 = vmatpush1.msra.mxu0 %v512
        %612 = vmatprep.subr.mxu0 0.0
        %613 = vmatpush1.msra.mxu0 %v514
        %614 = vmatprep.subr.mxu0 0.0
        %615 = vmatpush1.msra.mxu0 %v516
        %616 = vmatprep.subr.mxu0 0.0
        %617 = vmatpush1.msra.mxu0 %v518
        %618 = vmatprep.subr.mxu0 0.0
        %619 = vmatpush1.msra.mxu0 %v520
        %620 = vmatprep.subr.mxu0 0.0
        %621 = vmatpush1.msra.mxu0 %v522
        %622 = vmatprep.subr.mxu0 0.0
        %623 = vmatpush1.msra.mxu0 %v524
        %624 = vmatprep.subr.mxu0 0.0
        %625 = vmatpush1.msra.mxu0 %v526
        %626 = vmatprep.subr.mxu0 0.0
        %627 = vmatpush1.msra.mxu0 %v528
        %628 = vmatprep.subr.mxu0 0.0
        %629 = vmatpush1.msra.mxu0 %v530
        %630 = vmatprep.subr.mxu0 0.0
        %631 = vmatpush1.msra.mxu0 %v532
        %632 = vmatprep.subr.mxu0 0.0
        %633 = vmatpush1.msra.mxu0 %v534
        %634 = vmatprep.subr.mxu0 0.0
        %635 = vmatpush1.msra.mxu0 %v536
        %636 = vmatprep.subr.mxu0 0.0
        %637 = vmatpush1.msra.mxu0 %v538
        %638 = vmatprep.subr.mxu0 0.0
        %639 = vmatpush1.msra.mxu0 %v540
        %640 = vmatprep.subr.mxu0 0.0
        %641 = vmatpush1.msra.mxu0 %v542
        %642 = vmatprep.subr.mxu0 0.0
        %643 = vmatpush1.msra.mxu0 %v544
        %644 = vmatprep.subr.mxu0 0.0
        %645 = vmatpush1.msra.mxu0 %v546
        %646 = vmatprep.subr.mxu0 0.0
        %647 = vmatpush1.msra.mxu0 %v548
        %648 = vmatprep.subr.mxu0 0.0
        %649 = vmatpush1.msra.mxu0 %v550
        %650 = vmatprep.subr.mxu0 0.0
        %651 = vmatpush1.msra.mxu0 %v552
        %652 = vmatprep.subr.mxu0 0.0
        %653 = vmatpush1.msra.mxu0 %v554
        %654 = vmatprep.subr.mxu0 0.0
        %655 = vmatpush1.msra.mxu0 %v556
        %656 = vmatprep.subr.mxu0 0.0
        %657 = vmatpush1.msra.mxu0 %v558
        %658 = vmatprep.mubr.f32.mxu0 %v461
        %659 = vmatmul.mubr.f32.gmra.mrb[0].mxu0 %v455
        %v660 = vpop.f32.mrb[0].mxu0
        %v661 = vadd.f32 %v592, %v660
        %v662 = vpop.f32.mrb[0].mxu0
        %663 = vmatprep.mubr.f32.mxu0 %v462
        %664 = vmatmul.mubr.f32.gmra.mrb[0].mxu0 %v456
        %v665 = vpop.f32.mrb[0].mxu0
        %v666 = vadd.f32 %v592, %v665
        %v667 = vpop.f32.mrb[0].mxu0
        %668 = vdwg.mxu0
        %vm669 = vcmp.gt.f32.partialorder %v661, 0.0
        %vm670 = vcmp.gt.f32.partialorder %v666, 0.0
        %v671 = vmin.f32 %v661, 0.0
        %v672 = vmin.f32 %v666, 0.0
        %v673 = vmul.f32 %v671, 1.442695
        %v674 = vpow.pop %v673
        %v675 = vmul.f32 %v672, 1.442695
        %v676 = vpow.pop %v675
        %v677 = vsub.f32 %v674, 1.0
        %v678 = vsub.f32 %v676, 1.0
        %v679 = vsel %vm669, %v661, %v677
        %v680 = vsel %vm670, %v666, %v678
        %v681 = vsub.f32 0.0, %v661
        %v682 = vsub.f32 0.0, %v666
        %vm683 = vcmp.gt.f32.partialorder %v681, 0.0
        %vm684 = vcmp.gt.f32.partialorder %v682, 0.0
        %v685 = vmin.f32 %v681, 0.0
        %v686 = vmin.f32 %v682, 0.0
        %v687 = vmul.f32 %v685, 1.442695
        %v688 = vpow.pop %v687
        %v689 = vmul.f32 %v686, 1.442695
        %v690 = vpow.pop %v689
        %v691 = vsub.f32 %v688, 1.0
        %v692 = vsub.f32 %v690, 1.0
        %v693 = vsel %vm683, %v681, %v691
        %v694 = vsel %vm684, %v682, %v692
        %697 = vrot.lane.b32.xlu0 %v693, 64
        %v698 = vpop.permute.xlu0 %697
        %699 = vrot.lane.b32.xlu0 %v694, 64
        %v700 = vpop.permute.xlu0 %699
        %v703 = vsel %vm292, %v679, %v698
        %v704 = vsel %vm292, %v680, %v700
        %v705 = vrot.slane %v703, 7
        %v706 = vrot.slane %v704, 7
        %v707 = vsel %vm299, %v705, %v706
        %v708 = vsel %vm299, %v706, %v705
        %v709 = vsel %vm303, 0.0, %v708
        %v710 = vsel %vm304, 0.0, %v707
        %v711 = vld [vmem:[%s2 + $0x8] sm:$0xff]
        %v712 = vld [vmem:[%s2 + $0x30] sm:$0xff]
        %v713 = vld [vmem:[%s2 + $0x58] sm:$0xff]
        %v714 = vld [vmem:[%s2 + $0x80] sm:$0xff]
        %v715 = vld [vmem:[%s2 + $0xa8] sm:$0xff]
        %v716 = vld [vmem:[%s2 + $0xd0] sm:$0xff]
        %v717 = vld [vmem:[%s2 + $0xf8] sm:$0xff]
        %v718 = vld [vmem:[%s2 + $0x120] sm:$0xff]
        %v719 = vld [vmem:[%s2 + $0x148] sm:$0xff]
        %v720 = vld [vmem:[%s2 + $0x170] sm:$0xff]
        %v721 = vld [vmem:[%s2 + $0x198] sm:$0xff]
        %v722 = vld [vmem:[%s2 + $0x1c0] sm:$0xff]
        %v723 = vld [vmem:[%s2 + $0x1e8] sm:$0xff]
        %v724 = vld [vmem:[%s2 + $0x210] sm:$0xff]
        %v725 = vld [vmem:[%s2 + $0x238] sm:$0xff]
        %v726 = vld [vmem:[%s2 + $0x260] sm:$0xff]
        %v727 = vld [vmem:[%s2 + $0x288] sm:$0xff]
        %v728 = vld [vmem:[%s2 + $0x2b0] sm:$0xff]
        %v729 = vld [vmem:[%s2 + $0x2d8] sm:$0xff]
        %v730 = vld [vmem:[%s2 + $0x300] sm:$0xff]
        %v731 = vld [vmem:[%s2 + $0x328] sm:$0xff]
        %v732 = vld [vmem:[%s2 + $0x350] sm:$0xff]
        %v733 = vld [vmem:[%s2 + $0x378] sm:$0xff]
        %v734 = vld [vmem:[%s2 + $0x3a0] sm:$0xff]
        %v735 = vld [vmem:[%s2 + $0x3c8] sm:$0xff]
        %v736 = vld [vmem:[%s2 + $0x3f0] sm:$0xff]
        %v737 = vld [vmem:[%s2 + $0x418] sm:$0xff]
        %v738 = vld [vmem:[%s2 + $0x440] sm:$0xff]
        %v739 = vld [vmem:[%s2 + $0x468] sm:$0xff]
        %v740 = vld [vmem:[%s2 + $0x490] sm:$0xff]
        %v741 = vld [vmem:[%s2 + $0x4b8] sm:$0xff]
        %v742 = vld [vmem:[%s2 + $0x4e0] sm:$0xff]
        %v743 = vld [vmem:[%s3 + $0x1] sm:$0x1]
        %v745 = vlaneseq
        %v746 = vshrl.u32 %v745, 7
        %v747 = vsub.s32 0, %v746
        %v748 = vrot.slane %v743, %v747
        %750 = vmatprep.subr.mxu0 0.0
        %751 = vmatpush1.msra.mxu0 %v711
        %752 = vmatprep.subr.mxu0 0.0
        %753 = vmatpush1.msra.mxu0 %v712
        %754 = vmatprep.subr.mxu0 0.0
        %755 = vmatpush1.msra.mxu0 %v713
        %756 = vmatprep.subr.mxu0 0.0
        %757 = vmatpush1.msra.mxu0 %v714
        %758 = vmatprep.subr.mxu0 0.0
        %759 = vmatpush1.msra.mxu0 %v715
        %760 = vmatprep.subr.mxu0 0.0
        %761 = vmatpush1.msra.mxu0 %v716
        %762 = vmatprep.subr.mxu0 0.0
        %763 = vmatpush1.msra.mxu0 %v717
        %764 = vmatprep.subr.mxu0 0.0
        %765 = vmatpush1.msra.mxu0 %v718
        %766 = vmatprep.subr.mxu0 0.0
        %767 = vmatpush1.msra.mxu0 %v719
        %768 = vmatprep.subr.mxu0 0.0
        %769 = vmatpush1.msra.mxu0 %v720
        %770 = vmatprep.subr.mxu0 0.0
        %771 = vmatpush1.msra.mxu0 %v721
        %772 = vmatprep.subr.mxu0 0.0
        %773 = vmatpush1.msra.mxu0 %v722
        %774 = vmatprep.subr.mxu0 0.0
        %775 = vmatpush1.msra.mxu0 %v723
        %776 = vmatprep.subr.mxu0 0.0
        %777 = vmatpush1.msra.mxu0 %v724
        %778 = vmatprep.subr.mxu0 0.0
        %779 = vmatpush1.msra.mxu0 %v725
        %780 = vmatprep.subr.mxu0 0.0
        %781 = vmatpush1.msra.mxu0 %v726
        %782 = vmatprep.subr.mxu0 0.0
        %783 = vmatpush1.msra.mxu0 %v727
        %784 = vmatprep.subr.mxu0 0.0
        %785 = vmatpush1.msra.mxu0 %v728
        %786 = vmatprep.subr.mxu0 0.0
        %787 = vmatpush1.msra.mxu0 %v729
        %788 = vmatprep.subr.mxu0 0.0
        %789 = vmatpush1.msra.mxu0 %v730
        %790 = vmatprep.subr.mxu0 0.0
        %791 = vmatpush1.msra.mxu0 %v731
        %792 = vmatprep.subr.mxu0 0.0
        %793 = vmatpush1.msra.mxu0 %v732
        %794 = vmatprep.subr.mxu0 0.0
        %795 = vmatpush1.msra.mxu0 %v733
        %796 = vmatprep.subr.mxu0 0.0
        %797 = vmatpush1.msra.mxu0 %v734
        %798 = vmatprep.subr.mxu0 0.0
        %799 = vmatpush1.msra.mxu0 %v735
        %800 = vmatprep.subr.mxu0 0.0
        %801 = vmatpush1.msra.mxu0 %v736
        %802 = vmatprep.subr.mxu0 0.0
        %803 = vmatpush1.msra.mxu0 %v737
        %804 = vmatprep.subr.mxu0 0.0
        %805 = vmatpush1.msra.mxu0 %v738
        %806 = vmatprep.subr.mxu0 0.0
        %807 = vmatpush1.msra.mxu0 %v739
        %808 = vmatprep.subr.mxu0 0.0
        %809 = vmatpush1.msra.mxu0 %v740
        %810 = vmatprep.subr.mxu0 0.0
        %811 = vmatpush1.msra.mxu0 %v741
        %812 = vmatprep.subr.mxu0 0.0
        %813 = vmatpush1.msra.mxu0 %v742
        %814 = vmatprep.mubr.f32.mxu0 %v709
        %815 = vmatmul.mubr.f32.gmra.mrb[0].mxu0 %v703
        %v816 = vpop.f32.mrb[0].mxu0
        %v817 = vadd.f32 %v748, %v816
        %v818 = vpop.f32.mrb[0].mxu0
        %819 = vmatprep.mubr.f32.mxu0 %v710
        %820 = vmatmul.mubr.f32.gmra.mrb[0].mxu0 %v704
        %v821 = vpop.f32.mrb[0].mxu0
        %v822 = vadd.f32 %v748, %v821
        %v823 = vpop.f32.mrb[0].mxu0
        %824 = vdwg.mxu0
        %v825 = vxor.u32 %v817, 2147483648
        %v826 = vxor.u32 %v822, 2147483648
        %v827 = vmul.f32 %v825, 1.442695
        %v828 = vpow.pop %v827
        %v829 = vmul.f32 %v826, 1.442695
        %v830 = vpow.pop %v829
        %v831 = vadd.f32 %v828, 1.0
        %v832 = vadd.f32 %v830, 1.0
        %v833 = vrcp.pop %v831
        %v834 = vmul.f32 1.0, %v833
        %v835 = vrcp.pop %v832
        %v836 = vmul.f32 1.0, %v835
        %839 = vrot.lane.b32.xlu0 %v834, 64
        %v840 = vpop.permute.xlu0 %839
        %841 = vrot.lane.b32.xlu0 %v836, 64
        %v842 = vpop.permute.xlu0 %841
        %v845 = vmul.f32 %v817, %v840
        %v846 = vmul.f32 %v822, %v842
        %v847 = vadd.f32 %v845, %v254
        %v848 = vadd.f32 %v846, %v255
        %849 = vst.msk [vmem:[%s236] sm:$0xff] %vm292, %v847
        %850 = vst.msk [vmem:[%s236 + $0x8] sm:$0xff] %vm292, %v848
        %vm851 = vcmp.gt.f32.partialorder %v847, 0.0
        %vm852 = vcmp.gt.f32.partialorder %v848, 0.0
        %v853 = vmin.f32 %v847, 0.0
        %v854 = vmin.f32 %v848, 0.0
        %v855 = vmul.f32 %v853, 1.442695
        %v856 = vpow.pop %v855
        %v857 = vmul.f32 %v854, 1.442695
        %v858 = vpow.pop %v857
        %v859 = vsub.f32 %v856, 1.0
        %v860 = vsub.f32 %v858, 1.0
        %v861 = vsel %vm851, %v847, %v859
        %v862 = vsel %vm852, %v848, %v860
        %v863 = vsub.f32 0.0, %v847
        %v864 = vsub.f32 0.0, %v848
        %vm865 = vcmp.gt.f32.partialorder %v863, 0.0
        %vm866 = vcmp.gt.f32.partialorder %v864, 0.0
        %v867 = vmin.f32 %v863, 0.0
        %v868 = vmin.f32 %v864, 0.0
        %v869 = vmul.f32 %v867, 1.442695
        %v870 = vpow.pop %v869
        %v871 = vmul.f32 %v868, 1.442695
        %v872 = vpow.pop %v871
        %v873 = vsub.f32 %v870, 1.0
        %v874 = vsub.f32 %v872, 1.0
        %v875 = vsel %vm865, %v863, %v873
        %v876 = vsel %vm866, %v864, %v874
        %879 = vrot.lane.b32.xlu0 %v875, 64
        %v880 = vpop.permute.xlu0 %879
        %881 = vrot.lane.b32.xlu0 %v876, 64
        %v882 = vpop.permute.xlu0 %881
        %v885 = vsel %vm292, %v861, %v880
        %v886 = vsel %vm292, %v862, %v882
        %v887 = vld [vmem:[%s2 + $0x20] sm:$0xff]
        %v888 = vld [vmem:[%s2 + $0x48] sm:$0xff]
        %v889 = vld [vmem:[%s2 + $0x70] sm:$0xff]
        %v890 = vld [vmem:[%s2 + $0x98] sm:$0xff]
        %v891 = vld [vmem:[%s2 + $0xc0] sm:$0xff]
        %v892 = vld [vmem:[%s2 + $0xe8] sm:$0xff]
        %v893 = vld [vmem:[%s2 + $0x110] sm:$0xff]
        %v894 = vld [vmem:[%s2 + $0x138] sm:$0xff]
        %v895 = vld [vmem:[%s2 + $0x160] sm:$0xff]
        %v896 = vld [vmem:[%s2 + $0x188] sm:$0xff]
        %v897 = vld [vmem:[%s2 + $0x1b0] sm:$0xff]
        %v898 = vld [vmem:[%s2 + $0x1d8] sm:$0xff]
        %v899 = vld [vmem:[%s2 + $0x200] sm:$0xff]
        %v900 = vld [vmem:[%s2 + $0x228] sm:$0xff]
        %v901 = vld [vmem:[%s2 + $0x250] sm:$0xff]
        %v902 = vld [vmem:[%s2 + $0x278] sm:$0xff]
        %v903 = vld [vmem:[%s3 + $0x4] sm:$0x1]
        %v905 = vlaneseq
        %v906 = vshrl.u32 %v905, 7
        %v907 = vsub.s32 0, %v906
        %v908 = vrot.slane %v903, %v907
        %910 = vmatprep.subr.mxu0 0.0
        %911 = vmatpush1.msra.mxu0 %v887
        %912 = vmatprep.subr.mxu0 0.0
        %913 = vmatpush1.msra.mxu0 %v888
        %914 = vmatprep.subr.mxu0 0.0
        %915 = vmatpush1.msra.mxu0 %v889
        %916 = vmatprep.subr.mxu0 0.0
        %917 = vmatpush1.msra.mxu0 %v890
        %918 = vmatprep.subr.mxu0 0.0
        %919 = vmatpush1.msra.mxu0 %v891
        %920 = vmatprep.subr.mxu0 0.0
        %921 = vmatpush1.msra.mxu0 %v892
        %922 = vmatprep.subr.mxu0 0.0
        %923 = vmatpush1.msra.mxu0 %v893
        %924 = vmatprep.subr.mxu0 0.0
        %925 = vmatpush1.msra.mxu0 %v894
        %926 = vmatprep.subr.mxu0 0.0
        %927 = vmatpush1.msra.mxu0 %v895
        %928 = vmatprep.subr.mxu0 0.0
        %929 = vmatpush1.msra.mxu0 %v896
        %930 = vmatprep.subr.mxu0 0.0
        %931 = vmatpush1.msra.mxu0 %v897
        %932 = vmatprep.subr.mxu0 0.0
        %933 = vmatpush1.msra.mxu0 %v898
        %934 = vmatprep.subr.mxu0 0.0
        %935 = vmatpush1.msra.mxu0 %v899
        %936 = vmatprep.subr.mxu0 0.0
        %937 = vmatpush1.msra.mxu0 %v900
        %938 = vmatprep.subr.mxu0 0.0
        %939 = vmatpush1.msra.mxu0 %v901
        %940 = vmatprep.subr.mxu0 0.0
        %941 = vmatpush1.msra.mxu0 %v902
        %942 = vmatprep.subr.mxu0 0.0
        %943 = vmatpush1.msra.mxu0 0.0
        %944 = vmatprep.subr.mxu0 0.0
        %945 = vmatpush1.msra.mxu0 0.0
        %946 = vmatprep.subr.mxu0 0.0
        %947 = vmatpush1.msra.mxu0 0.0
        %948 = vmatprep.subr.mxu0 0.0
        %949 = vmatpush1.msra.mxu0 0.0
        %950 = vmatprep.subr.mxu0 0.0
        %951 = vmatpush1.msra.mxu0 0.0
        %952 = vmatprep.subr.mxu0 0.0
        %953 = vmatpush1.msra.mxu0 0.0
        %954 = vmatprep.subr.mxu0 0.0
        %955 = vmatpush1.msra.mxu0 0.0
        %956 = vmatprep.subr.mxu0 0.0
        %957 = vmatpush1.msra.mxu0 0.0
        %958 = vmatprep.subr.mxu0 0.0
        %959 = vmatpush1.msra.mxu0 0.0
        %960 = vmatprep.subr.mxu0 0.0
        %961 = vmatpush1.msra.mxu0 0.0
        %962 = vmatprep.subr.mxu0 0.0
        %963 = vmatpush1.msra.mxu0 0.0
        %964 = vmatprep.subr.mxu0 0.0
        %965 = vmatpush1.msra.mxu0 0.0
        %966 = vmatprep.subr.mxu0 0.0
        %967 = vmatpush1.msra.mxu0 0.0
        %968 = vmatprep.subr.mxu0 0.0
        %969 = vmatpush1.msra.mxu0 0.0
        %970 = vmatprep.subr.mxu0 0.0
        %971 = vmatpush1.msra.mxu0 0.0
        %972 = vmatprep.subr.mxu0 0.0
        %973 = vmatpush1.msra.mxu0 0.0
        %974 = vmatprep.mubr.f32.mxu0 0.0
        %975 = vmatmul.mubr.f32.gmra.mrb[0].mxu0 %v885
        %v976 = vpop.f32.mrb[0].mxu0
        %v977 = vadd.f32 %v908, %v976
        %v978 = vpop.f32.mrb[0].mxu0
        %979 = vmatprep.mubr.f32.mxu0 0.0
        %980 = vmatmul.mubr.f32.gmra.mrb[0].mxu0 %v886
        %v981 = vpop.f32.mrb[0].mxu0
        %v982 = vadd.f32 %v908, %v981
        %v983 = vpop.f32.mrb[0].mxu0
        %984 = vdwg.mxu0
        %vm985 = vcmp.gt.f32.partialorder %v256, 0.0
        %vm986 = vcmp.gt.f32.partialorder %v257, 0.0
        %v987 = vmin.f32 %v256, 0.0
        %v988 = vmin.f32 %v257, 0.0
        %v989 = vmul.f32 %v987, 1.442695
        %v990 = vpow.pop %v989
        %v991 = vmul.f32 %v988, 1.442695
        %v992 = vpow.pop %v991
        %v993 = vsub.f32 %v990, 1.0
        %v994 = vsub.f32 %v992, 1.0
        %v995 = vsel %vm985, %v256, %v993
        %v996 = vsel %vm986, %v257, %v994
        %v997 = vsub.f32 0.0, %v256
        %v998 = vsub.f32 0.0, %v257
        %vm999 = vcmp.gt.f32.partialorder %v997, 0.0
        %vm1000 = vcmp.gt.f32.partialorder %v998, 0.0
        %v1001 = vmin.f32 %v997, 0.0
        %v1002 = vmin.f32 %v998, 0.0
        %v1003 = vmul.f32 %v1001, 1.442695
        %v1004 = vpow.pop %v1003
        %v1005 = vmul.f32 %v1002, 1.442695
        %v1006 = vpow.pop %v1005
        %v1007 = vsub.f32 %v1004, 1.0
        %v1008 = vsub.f32 %v1006, 1.0
        %v1009 = vsel %vm999, %v997, %v1007
        %v1010 = vsel %vm1000, %v998, %v1008
        %1013 = vrot.lane.b32.xlu0 %v1009, 64
        %v1014 = vpop.permute.xlu0 %1013
        %1015 = vrot.lane.b32.xlu0 %v1010, 64
        %v1016 = vpop.permute.xlu0 %1015
        %v1019 = vsel %vm292, %v995, %v1014
        %v1020 = vsel %vm292, %v996, %v1016
        %v1021 = vrot.slane %v1019, 7
        %v1022 = vrot.slane %v1020, 7
        %v1023 = vsel %vm299, %v1021, %v1022
        %v1024 = vsel %vm299, %v1022, %v1021
        %v1025 = vsel %vm303, 0.0, %v1024
        %v1026 = vsel %vm304, 0.0, %v1023
        %v1027 = vld [vmem:[%s2 + $0x10] sm:$0xff]
        %v1028 = vld [vmem:[%s2 + $0x38] sm:$0xff]
        %v1029 = vld [vmem:[%s2 + $0x60] sm:$0xff]
        %v1030 = vld [vmem:[%s2 + $0x88] sm:$0xff]
        %v1031 = vld [vmem:[%s2 + $0xb0] sm:$0xff]
        %v1032 = vld [vmem:[%s2 + $0xd8] sm:$0xff]
        %v1033 = vld [vmem:[%s2 + $0x100] sm:$0xff]
        %v1034 = vld [vmem:[%s2 + $0x128] sm:$0xff]
        %v1035 = vld [vmem:[%s2 + $0x150] sm:$0xff]
        %v1036 = vld [vmem:[%s2 + $0x178] sm:$0xff]
        %v1037 = vld [vmem:[%s2 + $0x1a0] sm:$0xff]
        %v1038 = vld [vmem:[%s2 + $0x1c8] sm:$0xff]
        %v1039 = vld [vmem:[%s2 + $0x1f0] sm:$0xff]
        %v1040 = vld [vmem:[%s2 + $0x218] sm:$0xff]
        %v1041 = vld [vmem:[%s2 + $0x240] sm:$0xff]
        %v1042 = vld [vmem:[%s2 + $0x268] sm:$0xff]
        %v1043 = vld [vmem:[%s2 + $0x290] sm:$0xff]
        %v1044 = vld [vmem:[%s2 + $0x2b8] sm:$0xff]
        %v1045 = vld [vmem:[%s2 + $0x2e0] sm:$0xff]
        %v1046 = vld [vmem:[%s2 + $0x308] sm:$0xff]
        %v1047 = vld [vmem:[%s2 + $0x330] sm:$0xff]
        %v1048 = vld [vmem:[%s2 + $0x358] sm:$0xff]
        %v1049 = vld [vmem:[%s2 + $0x380] sm:$0xff]
        %v1050 = vld [vmem:[%s2 + $0x3a8] sm:$0xff]
        %v1051 = vld [vmem:[%s2 + $0x3d0] sm:$0xff]
        %v1052 = vld [vmem:[%s2 + $0x3f8] sm:$0xff]
        %v1053 = vld [vmem:[%s2 + $0x420] sm:$0xff]
        %v1054 = vld [vmem:[%s2 + $0x448] sm:$0xff]
        %v1055 = vld [vmem:[%s2 + $0x470] sm:$0xff]
        %v1056 = vld [vmem:[%s2 + $0x498] sm:$0xff]
        %v1057 = vld [vmem:[%s2 + $0x4c0] sm:$0xff]
        %v1058 = vld [vmem:[%s2 + $0x4e8] sm:$0xff]
        %v1059 = vld [vmem:[%s3 + $0x2] sm:$0x1]
        %v1061 = vlaneseq
        %v1062 = vshrl.u32 %v1061, 7
        %v1063 = vsub.s32 0, %v1062
        %v1064 = vrot.slane %v1059, %v1063
        %1066 = vmatprep.subr.mxu0 0.0
        %1067 = vmatpush1.msra.mxu0 %v1027
        %1068 = vmatprep.subr.mxu0 0.0
        %1069 = vmatpush1.msra.mxu0 %v1028
        %1070 = vmatprep.subr.mxu0 0.0
        %1071 = vmatpush1.msra.mxu0 %v1029
        %1072 = vmatprep.subr.mxu0 0.0
        %1073 = vmatpush1.msra.mxu0 %v1030
        %1074 = vmatprep.subr.mxu0 0.0
        %1075 = vmatpush1.msra.mxu0 %v1031
        %1076 = vmatprep.subr.mxu0 0.0
        %1077 = vmatpush1.msra.mxu0 %v1032
        %1078 = vmatprep.subr.mxu0 0.0
        %1079 = vmatpush1.msra.mxu0 %v1033
        %1080 = vmatprep.subr.mxu0 0.0
        %1081 = vmatpush1.msra.mxu0 %v1034
        %1082 = vmatprep.subr.mxu0 0.0
        %1083 = vmatpush1.msra.mxu0 %v1035
        %1084 = vmatprep.subr.mxu0 0.0
        %1085 = vmatpush1.msra.mxu0 %v1036
        %1086 = vmatprep.subr.mxu0 0.0
        %1087 = vmatpush1.msra.mxu0 %v1037
        %1088 = vmatprep.subr.mxu0 0.0
        %1089 = vmatpush1.msra.mxu0 %v1038
        %1090 = vmatprep.subr.mxu0 0.0
        %1091 = vmatpush1.msra.mxu0 %v1039
        %1092 = vmatprep.subr.mxu0 0.0
        %1093 = vmatpush1.msra.mxu0 %v1040
        %1094 = vmatprep.subr.mxu0 0.0
        %1095 = vmatpush1.msra.mxu0 %v1041
        %1096 = vmatprep.subr.mxu0 0.0
        %1097 = vmatpush1.msra.mxu0 %v1042
        %1098 = vmatprep.subr.mxu0 0.0
        %1099 = vmatpush1.msra.mxu0 %v1043
        %1100 = vmatprep.subr.mxu0 0.0
        %1101 = vmatpush1.msra.mxu0 %v1044
        %1102 = vmatprep.subr.mxu0 0.0
        %1103 = vmatpush1.msra.mxu0 %v1045
        %1104 = vmatprep.subr.mxu0 0.0
        %1105 = vmatpush1.msra.mxu0 %v1046
        %1106 = vmatprep.subr.mxu0 0.0
        %1107 = vmatpush1.msra.mxu0 %v1047
        %1108 = vmatprep.subr.mxu0 0.0
        %1109 = vmatpush1.msra.mxu0 %v1048
        %1110 = vmatprep.subr.mxu0 0.0
        %1111 = vmatpush1.msra.mxu0 %v1049
        %1112 = vmatprep.subr.mxu0 0.0
        %1113 = vmatpush1.msra.mxu0 %v1050
        %1114 = vmatprep.subr.mxu0 0.0
        %1115 = vmatpush1.msra.mxu0 %v1051
        %1116 = vmatprep.subr.mxu0 0.0
        %1117 = vmatpush1.msra.mxu0 %v1052
        %1118 = vmatprep.subr.mxu0 0.0
        %1119 = vmatpush1.msra.mxu0 %v1053
        %1120 = vmatprep.subr.mxu0 0.0
        %1121 = vmatpush1.msra.mxu0 %v1054
        %1122 = vmatprep.subr.mxu0 0.0
        %1123 = vmatpush1.msra.mxu0 %v1055
        %1124 = vmatprep.subr.mxu0 0.0
        %1125 = vmatpush1.msra.mxu0 %v1056
        %1126 = vmatprep.subr.mxu0 0.0
        %1127 = vmatpush1.msra.mxu0 %v1057
        %1128 = vmatprep.subr.mxu0 0.0
        %1129 = vmatpush1.msra.mxu0 %v1058
        %1130 = vmatprep.mubr.f32.mxu0 %v1025
        %1131 = vmatmul.mubr.f32.gmra.mrb[0].mxu0 %v1019
        %v1132 = vpop.f32.mrb[0].mxu0
        %v1133 = vadd.f32 %v1064, %v1132
        %v1134 = vpop.f32.mrb[0].mxu0
        %1135 = vmatprep.mubr.f32.mxu0 %v1026
        %1136 = vmatmul.mubr.f32.gmra.mrb[0].mxu0 %v1020
        %v1137 = vpop.f32.mrb[0].mxu0
        %v1138 = vadd.f32 %v1064, %v1137
        %v1139 = vpop.f32.mrb[0].mxu0
        %1140 = vdwg.mxu0
        %vm1141 = vcmp.gt.f32.partialorder %v1133, 0.0
        %vm1142 = vcmp.gt.f32.partialorder %v1138, 0.0
        %v1143 = vmin.f32 %v1133, 0.0
        %v1144 = vmin.f32 %v1138, 0.0
        %v1145 = vmul.f32 %v1143, 1.442695
        %v1146 = vpow.pop %v1145
        %v1147 = vmul.f32 %v1144, 1.442695
        %v1148 = vpow.pop %v1147
        %v1149 = vsub.f32 %v1146, 1.0
        %v1150 = vsub.f32 %v1148, 1.0
        %v1151 = vsel %vm1141, %v1133, %v1149
        %v1152 = vsel %vm1142, %v1138, %v1150
        %v1153 = vsub.f32 0.0, %v1133
        %v1154 = vsub.f32 0.0, %v1138
        %vm1155 = vcmp.gt.f32.partialorder %v1153, 0.0
        %vm1156 = vcmp.gt.f32.partialorder %v1154, 0.0
        %v1157 = vmin.f32 %v1153, 0.0
        %v1158 = vmin.f32 %v1154, 0.0
        %v1159 = vmul.f32 %v1157, 1.442695
        %v1160 = vpow.pop %v1159
        %v1161 = vmul.f32 %v1158, 1.442695
        %v1162 = vpow.pop %v1161
        %v1163 = vsub.f32 %v1160, 1.0
        %v1164 = vsub.f32 %v1162, 1.0
        %v1165 = vsel %vm1155, %v1153, %v1163
        %v1166 = vsel %vm1156, %v1154, %v1164
        %1169 = vrot.lane.b32.xlu0 %v1165, 64
        %v1170 = vpop.permute.xlu0 %1169
        %1171 = vrot.lane.b32.xlu0 %v1166, 64
        %v1172 = vpop.permute.xlu0 %1171
        %v1175 = vsel %vm292, %v1151, %v1170
        %v1176 = vsel %vm292, %v1152, %v1172
        %v1177 = vrot.slane %v1175, 7
        %v1178 = vrot.slane %v1176, 7
        %v1179 = vsel %vm299, %v1177, %v1178
        %v1180 = vsel %vm299, %v1178, %v1177
        %v1181 = vsel %vm303, 0.0, %v1180
        %v1182 = vsel %vm304, 0.0, %v1179
        %1215 = vrot.lane.b32.xlu0 %v1027, 64
        %v1216 = vpop.permute.xlu0 %1215
        %1217 = vrot.lane.b32.xlu0 %v1028, 64
        %v1218 = vpop.permute.xlu0 %1217
        %1219 = vrot.lane.b32.xlu0 %v1029, 64
        %v1220 = vpop.permute.xlu0 %1219
        %1221 = vrot.lane.b32.xlu0 %v1030, 64
        %v1222 = vpop.permute.xlu0 %1221
        %1223 = vrot.lane.b32.xlu0 %v1031, 64
        %v1224 = vpop.permute.xlu0 %1223
        %1225 = vrot.lane.b32.xlu0 %v1032, 64
        %v1226 = vpop.permute.xlu0 %1225
        %1227 = vrot.lane.b32.xlu0 %v1033, 64
        %v1228 = vpop.permute.xlu0 %1227
        %1229 = vrot.lane.b32.xlu0 %v1034, 64
        %v1230 = vpop.permute.xlu0 %1229
        %1231 = vrot.lane.b32.xlu0 %v1035, 64
        %v1232 = vpop.permute.xlu0 %1231
        %1233 = vrot.lane.b32.xlu0 %v1036, 64
        %v1234 = vpop.permute.xlu0 %1233
        %1235 = vrot.lane.b32.xlu0 %v1037, 64
        %v1236 = vpop.permute.xlu0 %1235
        %1237 = vrot.lane.b32.xlu0 %v1038, 64
        %v1238 = vpop.permute.xlu0 %1237
        %1239 = vrot.lane.b32.xlu0 %v1039, 64
        %v1240 = vpop.permute.xlu0 %1239
        %1241 = vrot.lane.b32.xlu0 %v1040, 64
        %v1242 = vpop.permute.xlu0 %1241
        %1243 = vrot.lane.b32.xlu0 %v1041, 64
        %v1244 = vpop.permute.xlu0 %1243
        %1245 = vrot.lane.b32.xlu0 %v1042, 64
        %v1246 = vpop.permute.xlu0 %1245
        %1247 = vrot.lane.b32.xlu0 %v1043, 64
        %v1248 = vpop.permute.xlu0 %1247
        %1249 = vrot.lane.b32.xlu0 %v1044, 64
        %v1250 = vpop.permute.xlu0 %1249
        %1251 = vrot.lane.b32.xlu0 %v1045, 64
        %v1252 = vpop.permute.xlu0 %1251
        %1253 = vrot.lane.b32.xlu0 %v1046, 64
        %v1254 = vpop.permute.xlu0 %1253
        %1255 = vrot.lane.b32.xlu0 %v1047, 64
        %v1256 = vpop.permute.xlu0 %1255
        %1257 = vrot.lane.b32.xlu0 %v1048, 64
        %v1258 = vpop.permute.xlu0 %1257
        %1259 = vrot.lane.b32.xlu0 %v1049, 64
        %v1260 = vpop.permute.xlu0 %1259
        %1261 = vrot.lane.b32.xlu0 %v1050, 64
        %v1262 = vpop.permute.xlu0 %1261
        %1263 = vrot.lane.b32.xlu0 %v1051, 64
        %v1264 = vpop.permute.xlu0 %1263
        %1265 = vrot.lane.b32.xlu0 %v1052, 64
        %v1266 = vpop.permute.xlu0 %1265
        %1267 = vrot.lane.b32.xlu0 %v1053, 64
        %v1268 = vpop.permute.xlu0 %1267
        %1269 = vrot.lane.b32.xlu0 %v1054, 64
        %v1270 = vpop.permute.xlu0 %1269
        %1271 = vrot.lane.b32.xlu0 %v1055, 64
        %v1272 = vpop.permute.xlu0 %1271
        %1273 = vrot.lane.b32.xlu0 %v1056, 64
        %v1274 = vpop.permute.xlu0 %1273
        %1275 = vrot.lane.b32.xlu0 %v1057, 64
        %v1276 = vpop.permute.xlu0 %1275
        %1277 = vrot.lane.b32.xlu0 %v1058, 64
        %v1278 = vpop.permute.xlu0 %1277
        %1311 = vrot.lane.b32.xlu0 %v1064, 64
        %v1312 = vpop.permute.xlu0 %1311
        %1314 = vmatprep.subr.mxu0 0.0
        %1315 = vmatpush1.msra.mxu0 %v1216
        %1316 = vmatprep.subr.mxu0 0.0
        %1317 = vmatpush1.msra.mxu0 %v1218
        %1318 = vmatprep.subr.mxu0 0.0
        %1319 = vmatpush1.msra.mxu0 %v1220
        %1320 = vmatprep.subr.mxu0 0.0
        %1321 = vmatpush1.msra.mxu0 %v1222
        %1322 = vmatprep.subr.mxu0 0.0
        %1323 = vmatpush1.msra.mxu0 %v1224
        %1324 = vmatprep.subr.mxu0 0.0
        %1325 = vmatpush1.msra.mxu0 %v1226
        %1326 = vmatprep.subr.mxu0 0.0
        %1327 = vmatpush1.msra.mxu0 %v1228
        %1328 = vmatprep.subr.mxu0 0.0
        %1329 = vmatpush1.msra.mxu0 %v1230
        %1330 = vmatprep.subr.mxu0 0.0
        %1331 = vmatpush1.msra.mxu0 %v1232
        %1332 = vmatprep.subr.mxu0 0.0
        %1333 = vmatpush1.msra.mxu0 %v1234
        %1334 = vmatprep.subr.mxu0 0.0
        %1335 = vmatpush1.msra.mxu0 %v1236
        %1336 = vmatprep.subr.mxu0 0.0
        %1337 = vmatpush1.msra.mxu0 %v1238
        %1338 = vmatprep.subr.mxu0 0.0
        %1339 = vmatpush1.msra.mxu0 %v1240
        %1340 = vmatprep.subr.mxu0 0.0
        %1341 = vmatpush1.msra.mxu0 %v1242
        %1342 = vmatprep.subr.mxu0 0.0
        %1343 = vmatpush1.msra.mxu0 %v1244
        %1344 = vmatprep.subr.mxu0 0.0
        %1345 = vmatpush1.msra.mxu0 %v1246
        %1346 = vmatprep.subr.mxu0 0.0
        %1347 = vmatpush1.msra.mxu0 %v1248
        %1348 = vmatprep.subr.mxu0 0.0
        %1349 = vmatpush1.msra.mxu0 %v1250
        %1350 = vmatprep.subr.mxu0 0.0
        %1351 = vmatpush1.msra.mxu0 %v1252
        %1352 = vmatprep.subr.mxu0 0.0
        %1353 = vmatpush1.msra.mxu0 %v1254
        %1354 = vmatprep.subr.mxu0 0.0
        %1355 = vmatpush1.msra.mxu0 %v1256
        %1356 = vmatprep.subr.mxu0 0.0
        %1357 = vmatpush1.msra.mxu0 %v1258
        %1358 = vmatprep.subr.mxu0 0.0
        %1359 = vmatpush1.msra.mxu0 %v1260
        %1360 = vmatprep.subr.mxu0 0.0
        %1361 = vmatpush1.msra.mxu0 %v1262
        %1362 = vmatprep.subr.mxu0 0.0
        %1363 = vmatpush1.msra.mxu0 %v1264
        %1364 = vmatprep.subr.mxu0 0.0
        %1365 = vmatpush1.msra.mxu0 %v1266
        %1366 = vmatprep.subr.mxu0 0.0
        %1367 = vmatpush1.msra.mxu0 %v1268
        %1368 = vmatprep.subr.mxu0 0.0
        %1369 = vmatpush1.msra.mxu0 %v1270
        %1370 = vmatprep.subr.mxu0 0.0
        %1371 = vmatpush1.msra.mxu0 %v1272
        %1372 = vmatprep.subr.mxu0 0.0
        %1373 = vmatpush1.msra.mxu0 %v1274
        %1374 = vmatprep.subr.mxu0 0.0
        %1375 = vmatpush1.msra.mxu0 %v1276
        %1376 = vmatprep.subr.mxu0 0.0
        %1377 = vmatpush1.msra.mxu0 %v1278
        %1378 = vmatprep.mubr.f32.mxu0 %v1181
        %1379 = vmatmul.mubr.f32.gmra.mrb[0].mxu0 %v1175
        %v1380 = vpop.f32.mrb[0].mxu0
        %v1381 = vadd.f32 %v1312, %v1380
        %v1382 = vpop.f32.mrb[0].mxu0
        %1383 = vmatprep.mubr.f32.mxu0 %v1182
        %1384 = vmatmul.mubr.f32.gmra.mrb[0].mxu0 %v1176
        %v1385 = vpop.f32.mrb[0].mxu0
        %v1386 = vadd.f32 %v1312, %v1385
        %v1387 = vpop.f32.mrb[0].mxu0
        %1388 = vdwg.mxu0
        %v1389 = vadd.f32 %v1381, %v977
        %v1390 = vadd.f32 %v1386, %v982
        %vm1391 = vcmp.gt.f32.partialorder %v1389, 0.0
        %vm1392 = vcmp.gt.f32.partialorder %v1390, 0.0
        %v1393 = vmin.f32 %v1389, 0.0
        %v1394 = vmin.f32 %v1390, 0.0
        %v1395 = vmul.f32 %v1393, 1.442695
        %v1396 = vpow.pop %v1395
        %v1397 = vmul.f32 %v1394, 1.442695
        %v1398 = vpow.pop %v1397
        %v1399 = vsub.f32 %v1396, 1.0
        %v1400 = vsub.f32 %v1398, 1.0
        %v1401 = vsel %vm1391, %v1389, %v1399
        %v1402 = vsel %vm1392, %v1390, %v1400
        %v1403 = vsub.f32 0.0, %v1389
        %v1404 = vsub.f32 0.0, %v1390
        %vm1405 = vcmp.gt.f32.partialorder %v1403, 0.0
        %vm1406 = vcmp.gt.f32.partialorder %v1404, 0.0
        %v1407 = vmin.f32 %v1403, 0.0
        %v1408 = vmin.f32 %v1404, 0.0
        %v1409 = vmul.f32 %v1407, 1.442695
        %v1410 = vpow.pop %v1409
        %v1411 = vmul.f32 %v1408, 1.442695
        %v1412 = vpow.pop %v1411
        %v1413 = vsub.f32 %v1410, 1.0
        %v1414 = vsub.f32 %v1412, 1.0
        %v1415 = vsel %vm1405, %v1403, %v1413
        %v1416 = vsel %vm1406, %v1404, %v1414
        %1419 = vrot.lane.b32.xlu0 %v1415, 64
        %v1420 = vpop.permute.xlu0 %1419
        %1421 = vrot.lane.b32.xlu0 %v1416, 64
        %v1422 = vpop.permute.xlu0 %1421
        %v1425 = vsel %vm292, %v1401, %v1420
        %v1426 = vsel %vm292, %v1402, %v1422
        %v1427 = vrot.slane %v1425, 7
        %v1428 = vrot.slane %v1426, 7
        %v1429 = vsel %vm299, %v1427, %v1428
        %v1430 = vsel %vm299, %v1428, %v1427
        %v1431 = vsel %vm303, 0.0, %v1430
        %v1432 = vsel %vm304, 0.0, %v1429
        %v1433 = vld [vmem:[%s2 + $0x18] sm:$0xff]
        %v1434 = vld [vmem:[%s2 + $0x40] sm:$0xff]
        %v1435 = vld [vmem:[%s2 + $0x68] sm:$0xff]
        %v1436 = vld [vmem:[%s2 + $0x90] sm:$0xff]
        %v1437 = vld [vmem:[%s2 + $0xb8] sm:$0xff]
        %v1438 = vld [vmem:[%s2 + $0xe0] sm:$0xff]
        %v1439 = vld [vmem:[%s2 + $0x108] sm:$0xff]
        %v1440 = vld [vmem:[%s2 + $0x130] sm:$0xff]
        %v1441 = vld [vmem:[%s2 + $0x158] sm:$0xff]
        %v1442 = vld [vmem:[%s2 + $0x180] sm:$0xff]
        %v1443 = vld [vmem:[%s2 + $0x1a8] sm:$0xff]
        %v1444 = vld [vmem:[%s2 + $0x1d0] sm:$0xff]
        %v1445 = vld [vmem:[%s2 + $0x1f8] sm:$0xff]
        %v1446 = vld [vmem:[%s2 + $0x220] sm:$0xff]
        %v1447 = vld [vmem:[%s2 + $0x248] sm:$0xff]
        %v1448 = vld [vmem:[%s2 + $0x270] sm:$0xff]
        %v1449 = vld [vmem:[%s2 + $0x298] sm:$0xff]
        %v1450 = vld [vmem:[%s2 + $0x2c0] sm:$0xff]
        %v1451 = vld [vmem:[%s2 + $0x2e8] sm:$0xff]
        %v1452 = vld [vmem:[%s2 + $0x310] sm:$0xff]
        %v1453 = vld [vmem:[%s2 + $0x338] sm:$0xff]
        %v1454 = vld [vmem:[%s2 + $0x360] sm:$0xff]
        %v1455 = vld [vmem:[%s2 + $0x388] sm:$0xff]
        %v1456 = vld [vmem:[%s2 + $0x3b0] sm:$0xff]
        %v1457 = vld [vmem:[%s2 + $0x3d8] sm:$0xff]
        %v1458 = vld [vmem:[%s2 + $0x400] sm:$0xff]
        %v1459 = vld [vmem:[%s2 + $0x428] sm:$0xff]
        %v1460 = vld [vmem:[%s2 + $0x450] sm:$0xff]
        %v1461 = vld [vmem:[%s2 + $0x478] sm:$0xff]
        %v1462 = vld [vmem:[%s2 + $0x4a0] sm:$0xff]
        %v1463 = vld [vmem:[%s2 + $0x4c8] sm:$0xff]
        %v1464 = vld [vmem:[%s2 + $0x4f0] sm:$0xff]
        %v1465 = vld [vmem:[%s3 + $0x3] sm:$0x1]
        %v1467 = vlaneseq
        %v1468 = vshrl.u32 %v1467, 7
        %v1469 = vsub.s32 0, %v1468
        %v1470 = vrot.slane %v1465, %v1469
        %1472 = vmatprep.subr.mxu0 0.0
        %1473 = vmatpush1.msra.mxu0 %v1433
        %1474 = vmatprep.subr.mxu0 0.0
        %1475 = vmatpush1.msra.mxu0 %v1434
        %1476 = vmatprep.subr.mxu0 0.0
        %1477 = vmatpush1.msra.mxu0 %v1435
        %1478 = vmatprep.subr.mxu0 0.0
        %1479 = vmatpush1.msra.mxu0 %v1436
        %1480 = vmatprep.subr.mxu0 0.0
        %1481 = vmatpush1.msra.mxu0 %v1437
        %1482 = vmatprep.subr.mxu0 0.0
        %1483 = vmatpush1.msra.mxu0 %v1438
        %1484 = vmatprep.subr.mxu0 0.0
        %1485 = vmatpush1.msra.mxu0 %v1439
        %1486 = vmatprep.subr.mxu0 0.0
        %1487 = vmatpush1.msra.mxu0 %v1440
        %1488 = vmatprep.subr.mxu0 0.0
        %1489 = vmatpush1.msra.mxu0 %v1441
        %1490 = vmatprep.subr.mxu0 0.0
        %1491 = vmatpush1.msra.mxu0 %v1442
        %1492 = vmatprep.subr.mxu0 0.0
        %1493 = vmatpush1.msra.mxu0 %v1443
        %1494 = vmatprep.subr.mxu0 0.0
        %1495 = vmatpush1.msra.mxu0 %v1444
        %1496 = vmatprep.subr.mxu0 0.0
        %1497 = vmatpush1.msra.mxu0 %v1445
        %1498 = vmatprep.subr.mxu0 0.0
        %1499 = vmatpush1.msra.mxu0 %v1446
        %1500 = vmatprep.subr.mxu0 0.0
        %1501 = vmatpush1.msra.mxu0 %v1447
        %1502 = vmatprep.subr.mxu0 0.0
        %1503 = vmatpush1.msra.mxu0 %v1448
        %1504 = vmatprep.subr.mxu0 0.0
        %1505 = vmatpush1.msra.mxu0 %v1449
        %1506 = vmatprep.subr.mxu0 0.0
        %1507 = vmatpush1.msra.mxu0 %v1450
        %1508 = vmatprep.subr.mxu0 0.0
        %1509 = vmatpush1.msra.mxu0 %v1451
        %1510 = vmatprep.subr.mxu0 0.0
        %1511 = vmatpush1.msra.mxu0 %v1452
        %1512 = vmatprep.subr.mxu0 0.0
        %1513 = vmatpush1.msra.mxu0 %v1453
        %1514 = vmatprep.subr.mxu0 0.0
        %1515 = vmatpush1.msra.mxu0 %v1454
        %1516 = vmatprep.subr.mxu0 0.0
        %1517 = vmatpush1.msra.mxu0 %v1455
        %1518 = vmatprep.subr.mxu0 0.0
        %1519 = vmatpush1.msra.mxu0 %v1456
        %1520 = vmatprep.subr.mxu0 0.0
        %1521 = vmatpush1.msra.mxu0 %v1457
        %1522 = vmatprep.subr.mxu0 0.0
        %1523 = vmatpush1.msra.mxu0 %v1458
        %1524 = vmatprep.subr.mxu0 0.0
        %1525 = vmatpush1.msra.mxu0 %v1459
        %1526 = vmatprep.subr.mxu0 0.0
        %1527 = vmatpush1.msra.mxu0 %v1460
        %1528 = vmatprep.subr.mxu0 0.0
        %1529 = vmatpush1.msra.mxu0 %v1461
        %1530 = vmatprep.subr.mxu0 0.0
        %1531 = vmatpush1.msra.mxu0 %v1462
        %1532 = vmatprep.subr.mxu0 0.0
        %1533 = vmatpush1.msra.mxu0 %v1463
        %1534 = vmatprep.subr.mxu0 0.0
        %1535 = vmatpush1.msra.mxu0 %v1464
        %1536 = vmatprep.mubr.f32.mxu0 %v1431
        %1537 = vmatmul.mubr.f32.gmra.mrb[0].mxu0 %v1425
        %v1538 = vpop.f32.mrb[0].mxu0
        %v1539 = vadd.f32 %v1470, %v1538
        %v1540 = vpop.f32.mrb[0].mxu0
        %1541 = vmatprep.mubr.f32.mxu0 %v1432
        %1542 = vmatmul.mubr.f32.gmra.mrb[0].mxu0 %v1426
        %v1543 = vpop.f32.mrb[0].mxu0
        %v1544 = vadd.f32 %v1470, %v1543
        %v1545 = vpop.f32.mrb[0].mxu0
        %1546 = vdwg.mxu0
        %v1547 = vxor.u32 %v1539, 2147483648
        %v1548 = vxor.u32 %v1544, 2147483648
        %v1549 = vmul.f32 %v1547, 1.442695
        %v1550 = vpow.pop %v1549
        %v1551 = vmul.f32 %v1548, 1.442695
        %v1552 = vpow.pop %v1551
        %v1553 = vadd.f32 %v1550, 1.0
        %v1554 = vadd.f32 %v1552, 1.0
        %v1555 = vrcp.pop %v1553
        %v1556 = vmul.f32 1.0, %v1555
        %v1557 = vrcp.pop %v1554
        %v1558 = vmul.f32 1.0, %v1557
        %1561 = vrot.lane.b32.xlu0 %v1556, 64
        %v1562 = vpop.permute.xlu0 %1561
        %1563 = vrot.lane.b32.xlu0 %v1558, 64
        %v1564 = vpop.permute.xlu0 %1563
        %v1567 = vmul.f32 %v1539, %v1562
        %v1568 = vmul.f32 %v1544, %v1564
        %v1569 = vadd.f32 %v1567, %v256
        %v1570 = vadd.f32 %v1568, %v257
        %1571 = vst.msk [vmem:[%s243] sm:$0xff] %vm292, %v1569
        %1572 = vst.msk [vmem:[%s243 + $0x8] sm:$0xff] %vm292, %v1570
        %s1573 = sand.u32 %s125, 1
        %s1574 = scalar_lea.sflag [#allocation3], %s1573
        %s1575 = sand.u32 %s125, 1
        %s1576 = smul.addr %s1575, 16
        %s1577 = scalar_lea.vmem [#allocation2], %s1576
        %s1578 = sand.u32 %s151, 1
        %s1579 = scalar_lea.sflag [#allocation5], %s1578
        %s1580 = sand.u32 %s151, 1
        %s1581 = smul.addr %s1580, 16
        %s1582 = scalar_lea.vmem [#allocation4], %s1581
        // Predicated region
        $region37: #{tpu_custom_call.1} parent=35 // pred_check
          %p1583 = pneg %p135
        $region38: #{tpu_custom_call.1} parent=35 // pred_check_branch
          %1585 = sbr.rel (%p1583) target = $region40
        $region39: #{tpu_custom_call.1} parent=35 // pred_region
          %s1587 = ssub.s32 256, 256
          %1588 = vsyncadd %s1574, %s1587
          %s1589 = smul.addr %s23, 2
          %s1590 = smul.addr %s1589, 128
          %s1591 = scalar_lea.hbm %s4, %s1590
          %s1592 = sshll.u32 %s1577, 4
          %s1593 = int_to_ptr.vmem [resolvable:$true] %s1592
          %1598 = dma.vmem_to_hbm [thread:$0]  %s1593, 256, %s1591, %s1574, 128, 128, 8
        $region40: #{tpu_custom_call.1} parent=35 // pred_fallthru
          _
        // Predicated region
        $region41: #{tpu_custom_call.1} parent=35 // pred_check
          %p1599 = pneg %p161
        $region42: #{tpu_custom_call.1} parent=35 // pred_check_branch
          %1601 = sbr.rel (%p1599) target = $region44
        $region43: #{tpu_custom_call.1} parent=35 // pred_region
          %s1603 = ssub.s32 256, 256
          %1604 = vsyncadd %s1579, %s1603
          %s1605 = smul.addr %s23, 2
          %s1606 = smul.addr %s1605, 128
          %s1607 = scalar_lea.hbm %s5, %s1606
          %s1608 = sshll.u32 %s1582, 4
          %s1609 = int_to_ptr.vmem [resolvable:$true] %s1608
          %1614 = dma.vmem_to_hbm [thread:$0]  %s1609, 256, %s1607, %s1579, 128, 128, 8
        $region44: #{tpu_custom_call.1} parent=35 // pred_fallthru
          _
      $region36: #{tpu_custom_call.1} parent=5 // pred_fallthru
        _
      %p1615 = scmp.le.s32.totalorder 2, %s18
      // Predicated region
      $region45: #{tpu_custom_call.1} parent=5 // pred_check
        %p1616 = pneg %p1615
      $region46: #{tpu_custom_call.1} parent=5 // pred_check_branch
        %1618 = sbr.rel (%p1616) target = $region48
      $region47: #{tpu_custom_call.1} parent=5 // pred_region
        %s1619 = ssub.s32 %s18, 2
        // Predicated region
        $region49: #{tpu_custom_call.1} parent=47 // pred_check
          %p1620 = pneg %p141
        $region50: #{tpu_custom_call.1} parent=47 // pred_check_branch
          %1622 = sbr.rel (%p1620) target = $region52
        $region51: #{tpu_custom_call.1} parent=47 // pred_region
          %s1623 = sand.u32 %s126, 1
          %s1624 = scalar_lea.sflag [#allocation3], %s1623
          %s1625 = sand.u32 %s126, 1
          %s1626 = smul.addr %s1625, 16
          %s1627 = scalar_lea.vmem [#allocation2], %s1626
          %1628 = dma.done %s1624, 256
        $region52: #{tpu_custom_call.1} parent=47 // pred_fallthru
          _
        // Predicated region
        $region53: #{tpu_custom_call.1} parent=47 // pred_check
          %p1629 = pneg %p167
        $region54: #{tpu_custom_call.1} parent=47 // pred_check_branch
          %1631 = sbr.rel (%p1629) target = $region56
        $region55: #{tpu_custom_call.1} parent=47 // pred_region
          %s1632 = sand.u32 %s152, 1
          %s1633 = scalar_lea.sflag [#allocation5], %s1632
          %s1634 = sand.u32 %s152, 1
          %s1635 = smul.addr %s1634, 16
          %s1636 = scalar_lea.vmem [#allocation4], %s1635
          %1637 = dma.done %s1633, 256
        $region56: #{tpu_custom_call.1} parent=47 // pred_fallthru
          _
      $region48: #{tpu_custom_call.1} parent=5 // pred_fallthru
        _
    $region6: #{tpu_custom_call.1} parent=1 // loop_footer
      %s22 = sadd.s32 1, %s18
    $region7: #{tpu_custom_call.1} parent=1 // loop_footer_branch
      %17 = sbr.rel target = $region3
    $region8: #{tpu_custom_call.1} parent=1 // loop_exit
      _
    %1638 = vsyncpa [#allocation3], 1
    %s1639 = scalar_lea.sflag [#allocation3], 1
    %1640 = vsyncpa %s1639, 1
    %1641 = vsyncpa [#allocation5], 1
    %s1642 = scalar_lea.sflag [#allocation5], 1
    %1643 = vsyncpa %s1642, 1

</llo_original>
